<compile_context>
chip_gen: v6e
topology: v6e:2x2x1
jax: 0.10.0
libtpu: 0.0.40
codegen_flags: <defaults>
</compile_context>

<pallas_src>
import functools

import jax
import jax.numpy as jnp
import numpy as np
from jax.experimental import pallas as pl
from jax.experimental.pallas import tpu as pltpu

OUT = 64      # output spatial size (64, 64)
KSIZE = 5     # depthwise conv kernel size
PAD = 2       # conv padding


# ----------------------------------------------------------------------------
# Host-side constant construction (float64, exact).
# ----------------------------------------------------------------------------
def _bilinear_matrix(in_size: int, out_size: int) -> np.ndarray:
    """(out_size, in_size) bilinear matrix, align_corners=True."""
    if in_size == 1:
        return np.ones((out_size, 1), np.float64)
    src = np.arange(out_size, dtype=np.float64) * (in_size - 1) / (out_size - 1)
    i0 = np.clip(np.floor(src).astype(np.int64), 0, in_size - 1)
    i1 = np.clip(i0 + 1, 0, in_size - 1)
    frac = src - i0
    A = np.zeros((out_size, in_size), np.float64)
    A[np.arange(out_size), i0] += 1.0 - frac
    A[np.arange(out_size), i1] += frac
    return A


def _shifted_interp(in_size: int, out_size: int) -> np.ndarray:
    """(KSIZE, out_size, in_size): interpolation matrix with conv tap offset d
    and the zero padding folded in:  S[d][o, h] = A[o, h + PAD - d] (0 if OOB).
    """
    A = _bilinear_matrix(in_size, out_size)
    S = np.zeros((KSIZE, out_size, in_size), np.float64)
    for d in range(KSIZE):
        for h in range(in_size):
            j = h + PAD - d
            if 0 <= j < in_size:
                S[d, :, h] = A[:, j]
    return S


def _build_fused_operator(kernel2d: np.ndarray, H: int, W: int) -> np.ndarray:
    """(H*W, OUT*OUT) operator folding pad + 5x5 conv + bilinear(64,64)."""
    sh = _shifted_interp(H, OUT)                       # (5, 64, H)
    sw = _shifted_interp(W, OUT)                       # (5, 64, W)
    b = np.einsum('yx,xpw->ypw', kernel2d, sw)         # (5, 64, W)
    g = np.einsum('yoh,ypw->hwop', sh, b)              # (H, W, 64, 64)
    return g.reshape(H * W, OUT * OUT)


_G_CACHE = {}


def _get_operator(kernel2d_np: np.ndarray, H: int, W: int) -> jnp.ndarray:
    """Cached bf16 device copy of the fused operator."""
    key = (H, W, kernel2d_np.tobytes())
    g = _G_CACHE.get(key)
    if g is None:
        g = jnp.asarray(_build_fused_operator(kernel2d_np, H, W), jnp.bfloat16)
        _G_CACHE[key] = g
    return g


# ----------------------------------------------------------------------------
# Pallas kernel: one MXU matmul per grid step.
#   x_ref : (B*C, H*W)   bf16, resident across steps (tiny)
#   g_ref : (H*W, tn)    bf16 column block of the fused operator
#   o_ref : (B*C, tn)    f32, lane-dense output slab
# ----------------------------------------------------------------------------
def _fused_kernel(x_ref, g_ref, o_ref):
    o_ref[...] = jnp.dot(x_ref[...], g_ref[...],
                         preferred_element_type=jnp.float32)


@functools.partial(jax.jit, static_argnames=("n_blocks",))
def _forward(x, g, *, n_blocks):
    B, C, H, W = x.shape
    M, K, N = B * C, H * W, OUT * OUT
    tn = N // n_blocks
    x_flat = x.reshape(M, K).astype(jnp.bfloat16)
    out_flat = pl.pallas_call(
        _fused_kernel,
        out_shape=jax.ShapeDtypeStruct((M, N), jnp.float32),
        grid=(n_blocks,),
        in_specs=[
            pl.BlockSpec((M, K), lambda j: (0, 0)),    # activations (resident)
            pl.BlockSpec((K, tn), lambda j: (0, j)),   # operator column block
        ],
        out_specs=pl.BlockSpec((M, tn), lambda j: (0, j)),
        compiler_params=pltpu.CompilerParams(
            dimension_semantics=("parallel",)),
    )(x_flat, g)
    return out_flat.reshape(B, C, OUT, OUT)


@functools.lru_cache(maxsize=1)
def _pick_n_blocks() -> int:
    # v7x has 2 TensorCores per chip: give each core >= 2 parallel grid steps.
    # Single-TC chips (v5e / v6e): one step, no per-step grid overhead.
    try:
        kind = jax.devices()[0].device_kind.lower()
    except Exception:
        return 2
    return 4 if "7" in kind else 1


def generator_b2a_ms(x: jnp.ndarray, weight: jnp.ndarray) -> jnp.ndarray:
    """x: (B, C, H, W), weight: (C, 1, 5, 5)  ->  (B, C, 64, 64) float32."""
    B, C, H, W = x.shape
    k = np.asarray(weight, np.float64).reshape(C, KSIZE, KSIZE)
    n_blocks = _pick_n_blocks()
    if np.allclose(k, k[0:1]):
        # Reference module: identical Gaussian per channel -> one shared fused
        # operator, one matmul for the whole (B*C) batch.
        g = _get_operator(np.ascontiguousarray(k[0]), H, W)
        return _forward(x, g, n_blocks=n_blocks)
    # Fallback (never hit by the reference module): per-channel operators.
    outs = [_forward(x[:, c:c + 1],
                     _get_operator(np.ascontiguousarray(k[c]), H, W),
                     n_blocks=n_blocks)
            for c in range(C)]
    return jnp.concatenate(outs, axis=1)


# ----------------------------------------------------------------------------
# float64 numpy reference (exact): depthwise conv (pad=2) + bilinear(64,64).
# ----------------------------------------------------------------------------
def _reference_np(x: np.ndarray, weight: np.ndarray) -> np.ndarray:
    x = np.asarray(x, np.float64)
    w = np.asarray(weight, np.float64)
    B, C, H, W = x.shape
    xpad = np.pad(x, ((0, 0), (0, 0), (PAD, PAD), (PAD, PAD)))
    conv = np.zeros_like(x)
    for dy in range(KSIZE):
        for dx in range(KSIZE):
            conv += w[None, :, 0, dy, dx, None, None] * \
                xpad[:, :, dy:dy + H, dx:dx + W]
    a_h = _bilinear_matrix(H, OUT)
    a_w = _bilinear_matrix(W, OUT)
    return np.einsum('oh,bchw,pw->bcop', a_h, conv, a_w)


if __name__ == "__main__":
    B, C, H, W = 2, 4, 16, 16
    key = jax.random.PRNGKey(0)
    x = jax.random.normal(key, (B, C, H, W), dtype=jnp.float32)

    # Fixed Gaussian kernel from __init__, repeated per channel -> (C, 1, 5, 5).
    k = np.array(
        [[0.0265, 0.0354, 0.039, 0.0354, 0.0265],
         [0.0354, 0.0473, 0.052, 0.0473, 0.0354],
         [0.039, 0.052, 0.0573, 0.052, 0.039],
         [0.0354, 0.0473, 0.052, 0.0473, 0.0354],
         [0.0265, 0.0354, 0.039, 0.0354, 0.0265]], dtype=np.float32)
    weight = jnp.asarray(np.repeat(k[None, None], C, axis=0))

    out = jax.block_until_ready(generator_b2a_ms(x, weight))
    assert out.shape == (B, C, OUT, OUT), out.shape

    ref = _reference_np(np.asarray(x), np.asarray(weight))
    err = float(np.max(np.abs(np.asarray(out, np.float64) - ref)))
    # bf16 operands (f32 accumulation / f32 output) -> relaxed tolerance.
    assert np.allclose(np.asarray(out, np.float64), ref,
                       rtol=3e-2, atol=3e-2), err

    print("KERNEL_OK")
</pallas_src>

<mosaic_0001>
module attributes {stable_mosaic.version = 11 : i64} {
  func.func @_fused_kernel(%arg0: i32, %arg1: memref<8x256xbf16, #tpu.memory_space<vmem>>, %arg2: memref<256x4096xbf16, #tpu.memory_space<vmem>>, %arg3: memref<8x4096xf32, #tpu.memory_space<vmem>>) attributes {dimension_semantics = [#tpu.dimension_semantics<parallel>], iteration_bounds = array<i64: 1>, scalar_prefetch = 0 : i64, scratch_operands = 0 : i64, tpu.core_type = #tpu.core_type<tc>, window_params = [{pipeline_mode = #tpu.pipeline_mode<synchronous>, transform_indices = @transform_0, window_bounds = array<i64: 8, 256>}, {transform_indices = @transform_1, window_bounds = array<i64: 256, 4096>}, {transform_indices = @transform_2, window_bounds = array<i64: 8, 4096>}]} {
    %c0 = arith.constant 0 : index
    %c0_0 = arith.constant 0 : index
    %0 = vector.load %arg1[%c0, %c0_0] : memref<8x256xbf16, #tpu.memory_space<vmem>>, vector<8x256xbf16>
    %c0_1 = arith.constant 0 : index
    %c0_2 = arith.constant 0 : index
    %1 = vector.load %arg2[%c0_1, %c0_2] : memref<256x4096xbf16, #tpu.memory_space<vmem>>, vector<256x4096xbf16>
    %cst = arith.constant dense<0.000000e+00> : vector<8x4096xf32>
    %2 = tpu.matmul %0, %1, %cst {dimension_numbers = #tpu.dot_dimension_numbers<[1], [0], [0], [1], [0, 0, 1, 1], [], []>} : vector<8x256xbf16>, vector<256x4096xbf16>, vector<8x4096xf32> -> vector<8x4096xf32>
    %c0_3 = arith.constant 0 : index
    %c0_4 = arith.constant 0 : index
    %3 = vector.load %arg3[%c0_3, %c0_4] : memref<8x4096xf32, #tpu.memory_space<vmem>>, vector<8x4096xf32>
    tpu.vector_store %arg3[%c0_3, %c0_4], %2 {strides = array<i32>} : memref<8x4096xf32, #tpu.memory_space<vmem>>, vector<8x4096xf32>,
    return
  }
  func.func @transform_0(%arg0: i32) -> (i32, i32) {
    %c0_i32 = arith.constant 0 : i32
    %c0_i32_0 = arith.constant 0 : i32
    %c0_i32_1 = arith.constant 0 : i32
    return %c0_i32, %c0_i32_0 : i32, i32
  }
  func.func @transform_1(%arg0: i32) -> (i32, i32) {
    %c0_i32 = arith.constant 0 : i32
    %c0_i32_0 = arith.constant 0 : i32
    return %c0_i32, %arg0 : i32, i32
  }
  func.func @transform_2(%arg0: i32) -> (i32, i32) {
    %c0_i32 = arith.constant 0 : i32
    %c0_i32_0 = arith.constant 0 : i32
    return %c0_i32, %arg0 : i32, i32
  }
}

</mosaic_0001>

<llo_original>
// kernel: _forward.1
$region0: #{_forward.1}
  #allocation0 [shape = 'u32[]', space=smem, size = 0x4, offset = 0x4, fixed_abs, tag = 'smem constant byte address 0x4 - core index']
  #allocation1 [shape = 'u32[144,128]{1,0:T(1,128)}', space=vmem, size = 0x12000, scoped, tag = 'internal scratch']
  %s0 = inlined_call_operand.vmem [shape: bf16[8,256], index: 0, kind: input, shape index: {}]
  %s1 = inlined_call_operand.hbm [shape: bf16[256,4096], index: 1, kind: input, shape index: {}]
  %s2 = inlined_call_operand.vmem [shape: f32[8,4096], index: 2, kind: output, shape index: {}]
  %s3 = sld [smem:[#allocation0]]
  $region22: #{_forward.1} parent=0
    _
  %s5 = ssub.s32 1, %s3
  %s6 = scalar_select 0, %s5, %s3
  $region1: #{_forward.1} parent=0
    #allocation2 [shape = 'u8[2097152]{0}', space=vmem, size = 0x200000, scoped, tag = 'input window, operand 1, single buffered']
    #allocation3 [shape = 's32[1]{0}', space=sflag, size = 0x4, scoped, tag = 'scoped memory for _forward.1']
    %7 = vsyncpa [#allocation3], 0
    // Predicated region
    $region2: #{_forward.1} parent=1 // pred_check
      _
    $region3: #{_forward.1} parent=1 // pred_check_branch
      %9 = sbr.rel (0) target = $region5
    $region4: #{_forward.1} parent=1 // pred_region
      _
    $region5: #{_forward.1} parent=1 // pred_fallthru
      _
    // Predicated region
    $region6: #{_forward.1} parent=1 // pred_check
      _
    $region7: #{_forward.1} parent=1 // pred_check_branch
      %11 = sbr.rel (0) target = $region9
    $region8: #{_forward.1} parent=1 // pred_region
      %s13 = ssub.s32 65536, 65536
      %14 = vsyncadd [#allocation3], %s13
      %s15 = sshll.u32 [#allocation2], 4
      %s16 = int_to_ptr.vmem [resolvable:$true] %s15
      %21 = dma.hbm_to_vmem [thread:$0]  %s1, 65536, %s16, [#allocation3], 2048, 2048, 128
    $region9: #{_forward.1} parent=1 // pred_fallthru
      _
    // Predicated region
    $region10: #{_forward.1} parent=1 // pred_check
      _
    $region11: #{_forward.1} parent=1 // pred_check_branch
      %23 = sbr.rel (0) target = $region13
    $region12: #{_forward.1} parent=1 // pred_region
      %24 = dma.done [#allocation3], 65536
    $region13: #{_forward.1} parent=1 // pred_fallthru
      _
    %v25 = vld [vmem:[%s0] sm:$0xff]
    %v26 = vld [vmem:[#allocation2] sm:$0xff]
    %v27 = vld [vmem:[#allocation2 + $0x8] sm:$0xff]
    %v28 = vld [vmem:[#allocation2 + $0x10] sm:$0xff]
    %v29 = vld [vmem:[#allocation2 + $0x18] sm:$0xff]
    %v30 = vld [vmem:[#allocation2 + $0x20] sm:$0xff]
    %v31 = vld [vmem:[#allocation2 + $0x28] sm:$0xff]
    %v32 = vld [vmem:[#allocation2 + $0x30] sm:$0xff]
    %v33 = vld [vmem:[#allocation2 + $0x38] sm:$0xff]
    %v34 = vld [vmem:[#allocation2 + $0x40] sm:$0xff]
    %v35 = vld [vmem:[#allocation2 + $0x48] sm:$0xff]
    %v36 = vld [vmem:[#allocation2 + $0x50] sm:$0xff]
    %v37 = vld [vmem:[#allocation2 + $0x58] sm:$0xff]
    %v38 = vld [vmem:[#allocation2 + $0x60] sm:$0xff]
    %v39 = vld [vmem:[#allocation2 + $0x68] sm:$0xff]
    %v40 = vld [vmem:[#allocation2 + $0x70] sm:$0xff]
    %v41 = vld [vmem:[#allocation2 + $0x78] sm:$0xff]
    %v42 = vld [vmem:[#allocation2 + $0x80] sm:$0xff]
    %v43 = vld [vmem:[#allocation2 + $0x88] sm:$0xff]
    %v44 = vld [vmem:[#allocation2 + $0x90] sm:$0xff]
    %v45 = vld [vmem:[#allocation2 + $0x98] sm:$0xff]
    %v46 = vld [vmem:[#allocation2 + $0xa0] sm:$0xff]
    %v47 = vld [vmem:[#allocation2 + $0xa8] sm:$0xff]
    %v48 = vld [vmem:[#allocation2 + $0xb0] sm:$0xff]
    %v49 = vld [vmem:[#allocation2 + $0xb8] sm:$0xff]
    %v50 = vld [vmem:[#allocation2 + $0xc0] sm:$0xff]
    %v51 = vld [vmem:[#allocation2 + $0xc8] sm:$0xff]
    %v52 = vld [vmem:[#allocation2 + $0xd0] sm:$0xff]
    %v53 = vld [vmem:[#allocation2 + $0xd8] sm:$0xff]
    %v54 = vld [vmem:[#allocation2 + $0xe0] sm:$0xff]
    %v55 = vld [vmem:[#allocation2 + $0xe8] sm:$0xff]
    %v56 = vld [vmem:[#allocation2 + $0xf0] sm:$0xff]
    %v57 = vld [vmem:[#allocation2 + $0xf8] sm:$0xff]
    %v58 = vld [vmem:[#allocation2 + $0x100] sm:$0xff]
    %v59 = vld [vmem:[#allocation2 + $0x108] sm:$0xff]
    %v60 = vld [vmem:[#allocation2 + $0x110] sm:$0xff]
    %v61 = vld [vmem:[#allocation2 + $0x118] sm:$0xff]
    %v62 = vld [vmem:[#allocation2 + $0x120] sm:$0xff]
    %v63 = vld [vmem:[#allocation2 + $0x128] sm:$0xff]
    %v64 = vld [vmem:[#allocation2 + $0x130] sm:$0xff]
    %v65 = vld [vmem:[#allocation2 + $0x138] sm:$0xff]
    %v66 = vld [vmem:[#allocation2 + $0x140] sm:$0xff]
    %v67 = vld [vmem:[#allocation2 + $0x148] sm:$0xff]
    %v68 = vld [vmem:[#allocation2 + $0x150] sm:$0xff]
    %v69 = vld [vmem:[#allocation2 + $0x158] sm:$0xff]
    %v70 = vld [vmem:[#allocation2 + $0x160] sm:$0xff]
    %v71 = vld [vmem:[#allocation2 + $0x168] sm:$0xff]
    %v72 = vld [vmem:[#allocation2 + $0x170] sm:$0xff]
    %v73 = vld [vmem:[#allocation2 + $0x178] sm:$0xff]
    %v74 = vld [vmem:[#allocation2 + $0x180] sm:$0xff]
    %v75 = vld [vmem:[#allocation2 + $0x188] sm:$0xff]
    %v76 = vld [vmem:[#allocation2 + $0x190] sm:$0xff]
    %v77 = vld [vmem:[#allocation2 + $0x198] sm:$0xff]
    %v78 = vld [vmem:[#allocation2 + $0x1a0] sm:$0xff]
    %v79 = vld [vmem:[#allocation2 + $0x1a8] sm:$0xff]
    %v80 = vld [vmem:[#allocation2 + $0x1b0] sm:$0xff]
    %v81 = vld [vmem:[#allocation2 + $0x1b8] sm:$0xff]
    %v82 = vld [vmem:[#allocation2 + $0x1c0] sm:$0xff]
    %v83 = vld [vmem:[#allocation2 + $0x1c8] sm:$0xff]
    %v84 = vld [vmem:[#allocation2 + $0x1d0] sm:$0xff]
    %v85 = vld [vmem:[#allocation2 + $0x1d8] sm:$0xff]
    %v86 = vld [vmem:[#allocation2 + $0x1e0] sm:$0xff]
    %v87 = vld [vmem:[#allocation2 + $0x1e8] sm:$0xff]
    %v88 = vld [vmem:[#allocation2 + $0x1f0] sm:$0xff]
    %v89 = vld [vmem:[#allocation2 + $0x1f8] sm:$0xff]
    %v90 = vld [vmem:[#allocation2 + $0x200] sm:$0xff]
    %v91 = vld [vmem:[#allocation2 + $0x208] sm:$0xff]
    %v92 = vld [vmem:[#allocation2 + $0x210] sm:$0xff]
    %v93 = vld [vmem:[#allocation2 + $0x218] sm:$0xff]
    %v94 = vld [vmem:[#allocation2 + $0x220] sm:$0xff]
    %v95 = vld [vmem:[#allocation2 + $0x228] sm:$0xff]
    %v96 = vld [vmem:[#allocation2 + $0x230] sm:$0xff]
    %v97 = vld [vmem:[#allocation2 + $0x238] sm:$0xff]
    %v98 = vld [vmem:[#allocation2 + $0x240] sm:$0xff]
    %v99 = vld [vmem:[#allocation2 + $0x248] sm:$0xff]
    %v100 = vld [vmem:[#allocation2 + $0x250] sm:$0xff]
    %v101 = vld [vmem:[#allocation2 + $0x258] sm:$0xff]
    %v102 = vld [vmem:[#allocation2 + $0x260] sm:$0xff]
    %v103 = vld [vmem:[#allocation2 + $0x268] sm:$0xff]
    %v104 = vld [vmem:[#allocation2 + $0x270] sm:$0xff]
    %v105 = vld [vmem:[#allocation2 + $0x278] sm:$0xff]
    %v106 = vld [vmem:[#allocation2 + $0x280] sm:$0xff]
    %v107 = vld [vmem:[#allocation2 + $0x288] sm:$0xff]
    %v108 = vld [vmem:[#allocation2 + $0x290] sm:$0xff]
    %v109 = vld [vmem:[#allocation2 + $0x298] sm:$0xff]
    %v110 = vld [vmem:[#allocation2 + $0x2a0] sm:$0xff]
    %v111 = vld [vmem:[#allocation2 + $0x2a8] sm:$0xff]
    %v112 = vld [vmem:[#allocation2 + $0x2b0] sm:$0xff]
    %v113 = vld [vmem:[#allocation2 + $0x2b8] sm:$0xff]
    %v114 = vld [vmem:[#allocation2 + $0x2c0] sm:$0xff]
    %v115 = vld [vmem:[#allocation2 + $0x2c8] sm:$0xff]
    %v116 = vld [vmem:[#allocation2 + $0x2d0] sm:$0xff]
    %v117 = vld [vmem:[#allocation2 + $0x2d8] sm:$0xff]
    %v118 = vld [vmem:[#allocation2 + $0x2e0] sm:$0xff]
    %v119 = vld [vmem:[#allocation2 + $0x2e8] sm:$0xff]
    %v120 = vld [vmem:[#allocation2 + $0x2f0] sm:$0xff]
    %v121 = vld [vmem:[#allocation2 + $0x2f8] sm:$0xff]
    %v122 = vld [vmem:[#allocation2 + $0x300] sm:$0xff]
    %v123 = vld [vmem:[#allocation2 + $0x308] sm:$0xff]
    %v124 = vld [vmem:[#allocation2 + $0x310] sm:$0xff]
    %v125 = vld [vmem:[#allocation2 + $0x318] sm:$0xff]
    %v126 = vld [vmem:[#allocation2 + $0x320] sm:$0xff]
    %v127 = vld [vmem:[#allocation2 + $0x328] sm:$0xff]
    %v128 = vld [vmem:[#allocation2 + $0x330] sm:$0xff]
    %v129 = vld [vmem:[#allocation2 + $0x338] sm:$0xff]
    %v130 = vld [vmem:[#allocation2 + $0x340] sm:$0xff]
    %v131 = vld [vmem:[#allocation2 + $0x348] sm:$0xff]
    %v132 = vld [vmem:[#allocation2 + $0x350] sm:$0xff]
    %v133 = vld [vmem:[#allocation2 + $0x358] sm:$0xff]
    %v134 = vld [vmem:[#allocation2 + $0x360] sm:$0xff]
    %v135 = vld [vmem:[#allocation2 + $0x368] sm:$0xff]
    %v136 = vld [vmem:[#allocation2 + $0x370] sm:$0xff]
    %v137 = vld [vmem:[#allocation2 + $0x378] sm:$0xff]
    %v138 = vld [vmem:[#allocation2 + $0x380] sm:$0xff]
    %v139 = vld [vmem:[#allocation2 + $0x388] sm:$0xff]
    %v140 = vld [vmem:[#allocation2 + $0x390] sm:$0xff]
    %v141 = vld [vmem:[#allocation2 + $0x398] sm:$0xff]
    %v142 = vld [vmem:[#allocation2 + $0x3a0] sm:$0xff]
    %v143 = vld [vmem:[#allocation2 + $0x3a8] sm:$0xff]
    %v144 = vld [vmem:[#allocation2 + $0x3b0] sm:$0xff]
    %v145 = vld [vmem:[#allocation2 + $0x3b8] sm:$0xff]
    %v146 = vld [vmem:[#allocation2 + $0x3c0] sm:$0xff]
    %v147 = vld [vmem:[#allocation2 + $0x3c8] sm:$0xff]
    %v148 = vld [vmem:[#allocation2 + $0x3d0] sm:$0xff]
    %v149 = vld [vmem:[#allocation2 + $0x3d8] sm:$0xff]
    %v150 = vld [vmem:[#allocation2 + $0x3e0] sm:$0xff]
    %v151 = vld [vmem:[#allocation2 + $0x3e8] sm:$0xff]
    %v152 = vld [vmem:[#allocation2 + $0x3f0] sm:$0xff]
    %v153 = vld [vmem:[#allocation2 + $0x3f8] sm:$0xff]
    %v154 = vld [vmem:[#allocation2 + $0x400] sm:$0xff]
    %v155 = vld [vmem:[#allocation2 + $0x408] sm:$0xff]
    %v156 = vld [vmem:[#allocation2 + $0x410] sm:$0xff]
    %v157 = vld [vmem:[#allocation2 + $0x418] sm:$0xff]
    %v158 = vld [vmem:[#allocation2 + $0x420] sm:$0xff]
    %v159 = vld [vmem:[#allocation2 + $0x428] sm:$0xff]
    %v160 = vld [vmem:[#allocation2 + $0x430] sm:$0xff]
    %v161 = vld [vmem:[#allocation2 + $0x438] sm:$0xff]
    %v162 = vld [vmem:[#allocation2 + $0x440] sm:$0xff]
    %v163 = vld [vmem:[#allocation2 + $0x448] sm:$0xff]
    %v164 = vld [vmem:[#allocation2 + $0x450] sm:$0xff]
    %v165 = vld [vmem:[#allocation2 + $0x458] sm:$0xff]
    %v166 = vld [vmem:[#allocation2 + $0x460] sm:$0xff]
    %v167 = vld [vmem:[#allocation2 + $0x468] sm:$0xff]
    %v168 = vld [vmem:[#allocation2 + $0x470] sm:$0xff]
    %v169 = vld [vmem:[#allocation2 + $0x478] sm:$0xff]
    %v170 = vld [vmem:[#allocation2 + $0x480] sm:$0xff]
    %v171 = vld [vmem:[#allocation2 + $0x488] sm:$0xff]
    %v172 = vld [vmem:[#allocation2 + $0x490] sm:$0xff]
    %v173 = vld [vmem:[#allocation2 + $0x498] sm:$0xff]
    %v174 = vld [vmem:[#allocation2 + $0x4a0] sm:$0xff]
    %v175 = vld [vmem:[#allocation2 + $0x4a8] sm:$0xff]
    %v176 = vld [vmem:[#allocation2 + $0x4b0] sm:$0xff]
    %v177 = vld [vmem:[#allocation2 + $0x4b8] sm:$0xff]
    %v178 = vld [vmem:[#allocation2 + $0x4c0] sm:$0xff]
    %v179 = vld [vmem:[#allocation2 + $0x4c8] sm:$0xff]
    %v180 = vld [vmem:[#allocation2 + $0x4d0] sm:$0xff]
    %v181 = vld [vmem:[#allocation2 + $0x4d8] sm:$0xff]
    %v182 = vld [vmem:[#allocation2 + $0x4e0] sm:$0xff]
    %v183 = vld [vmem:[#allocation2 + $0x4e8] sm:$0xff]
    %v184 = vld [vmem:[#allocation2 + $0x4f0] sm:$0xff]
    %v185 = vld [vmem:[#allocation2 + $0x4f8] sm:$0xff]
    %v186 = vld [vmem:[#allocation2 + $0x500] sm:$0xff]
    %v187 = vld [vmem:[#allocation2 + $0x508] sm:$0xff]
    %v188 = vld [vmem:[#allocation2 + $0x510] sm:$0xff]
    %v189 = vld [vmem:[#allocation2 + $0x518] sm:$0xff]
    %v190 = vld [vmem:[#allocation2 + $0x520] sm:$0xff]
    %v191 = vld [vmem:[#allocation2 + $0x528] sm:$0xff]
    %v192 = vld [vmem:[#allocation2 + $0x530] sm:$0xff]
    %v193 = vld [vmem:[#allocation2 + $0x538] sm:$0xff]
    %v194 = vld [vmem:[#allocation2 + $0x540] sm:$0xff]
    %v195 = vld [vmem:[#allocation2 + $0x548] sm:$0xff]
    %v196 = vld [vmem:[#allocation2 + $0x550] sm:$0xff]
    %v197 = vld [vmem:[#allocation2 + $0x558] sm:$0xff]
    %v198 = vld [vmem:[#allocation2 + $0x560] sm:$0xff]
    %v199 = vld [vmem:[#allocation2 + $0x568] sm:$0xff]
    %v200 = vld [vmem:[#allocation2 + $0x570] sm:$0xff]
    %v201 = vld [vmem:[#allocation2 + $0x578] sm:$0xff]
    %v202 = vld [vmem:[#allocation2 + $0x580] sm:$0xff]
    %v203 = vld [vmem:[#allocation2 + $0x588] sm:$0xff]
    %v204 = vld [vmem:[#allocation2 + $0x590] sm:$0xff]
    %v205 = vld [vmem:[#allocation2 + $0x598] sm:$0xff]
    %v206 = vld [vmem:[#allocation2 + $0x5a0] sm:$0xff]
    %v207 = vld [vmem:[#allocation2 + $0x5a8] sm:$0xff]
    %v208 = vld [vmem:[#allocation2 + $0x5b0] sm:$0xff]
    %v209 = vld [vmem:[#allocation2 + $0x5b8] sm:$0xff]
    %v210 = vld [vmem:[#allocation2 + $0x5c0] sm:$0xff]
    %v211 = vld [vmem:[#allocation2 + $0x5c8] sm:$0xff]
    %v212 = vld [vmem:[#allocation2 + $0x5d0] sm:$0xff]
    %v213 = vld [vmem:[#allocation2 + $0x5d8] sm:$0xff]
    %v214 = vld [vmem:[#allocation2 + $0x5e0] sm:$0xff]
    %v215 = vld [vmem:[#allocation2 + $0x5e8] sm:$0xff]
    %v216 = vld [vmem:[#allocation2 + $0x5f0] sm:$0xff]
    %v217 = vld [vmem:[#allocation2 + $0x5f8] sm:$0xff]
    %v218 = vld [vmem:[#allocation2 + $0x600] sm:$0xff]
    %v219 = vld [vmem:[#allocation2 + $0x608] sm:$0xff]
    %v220 = vld [vmem:[#allocation2 + $0x610] sm:$0xff]
    %v221 = vld [vmem:[#allocation2 + $0x618] sm:$0xff]
    %v222 = vld [vmem:[#allocation2 + $0x620] sm:$0xff]
    %v223 = vld [vmem:[#allocation2 + $0x628] sm:$0xff]
    %v224 = vld [vmem:[#allocation2 + $0x630] sm:$0xff]
    %v225 = vld [vmem:[#allocation2 + $0x638] sm:$0xff]
    %v226 = vld [vmem:[#allocation2 + $0x640] sm:$0xff]
    %v227 = vld [vmem:[#allocation2 + $0x648] sm:$0xff]
    %v228 = vld [vmem:[#allocation2 + $0x650] sm:$0xff]
    %v229 = vld [vmem:[#allocation2 + $0x658] sm:$0xff]
    %v230 = vld [vmem:[#allocation2 + $0x660] sm:$0xff]
    %v231 = vld [vmem:[#allocation2 + $0x668] sm:$0xff]
    %v232 = vld [vmem:[#allocation2 + $0x670] sm:$0xff]
    %v233 = vld [vmem:[#allocation2 + $0x678] sm:$0xff]
    %v234 = vld [vmem:[#allocation2 + $0x680] sm:$0xff]
    %v235 = vld [vmem:[#allocation2 + $0x688] sm:$0xff]
    %v236 = vld [vmem:[#allocation2 + $0x690] sm:$0xff]
    %v237 = vld [vmem:[#allocation2 + $0x698] sm:$0xff]
    %v238 = vld [vmem:[#allocation2 + $0x6a0] sm:$0xff]
    %v239 = vld [vmem:[#allocation2 + $0x6a8] sm:$0xff]
    %v240 = vld [vmem:[#allocation2 + $0x6b0] sm:$0xff]
    %v241 = vld [vmem:[#allocation2 + $0x6b8] sm:$0xff]
    %v242 = vld [vmem:[#allocation2 + $0x6c0] sm:$0xff]
    %v243 = vld [vmem:[#allocation2 + $0x6c8] sm:$0xff]
    %v244 = vld [vmem:[#allocation2 + $0x6d0] sm:$0xff]
    %v245 = vld [vmem:[#allocation2 + $0x6d8] sm:$0xff]
    %v246 = vld [vmem:[#allocation2 + $0x6e0] sm:$0xff]
    %v247 = vld [vmem:[#allocation2 + $0x6e8] sm:$0xff]
    %v248 = vld [vmem:[#allocation2 + $0x6f0] sm:$0xff]
    %v249 = vld [vmem:[#allocation2 + $0x6f8] sm:$0xff]
    %v250 = vld [vmem:[#allocation2 + $0x700] sm:$0xff]
    %v251 = vld [vmem:[#allocation2 + $0x708] sm:$0xff]
    %v252 = vld [vmem:[#allocation2 + $0x710] sm:$0xff]
    %v253 = vld [vmem:[#allocation2 + $0x718] sm:$0xff]
    %v254 = vld [vmem:[#allocation2 + $0x720] sm:$0xff]
    %v255 = vld [vmem:[#allocation2 + $0x728] sm:$0xff]
    %v256 = vld [vmem:[#allocation2 + $0x730] sm:$0xff]
    %v257 = vld [vmem:[#allocation2 + $0x738] sm:$0xff]
    %v258 = vld [vmem:[#allocation2 + $0x740] sm:$0xff]
    %v259 = vld [vmem:[#allocation2 + $0x748] sm:$0xff]
    %v260 = vld [vmem:[#allocation2 + $0x750] sm:$0xff]
    %v261 = vld [vmem:[#allocation2 + $0x758] sm:$0xff]
    %v262 = vld [vmem:[#allocation2 + $0x760] sm:$0xff]
    %v263 = vld [vmem:[#allocation2 + $0x768] sm:$0xff]
    %v264 = vld [vmem:[#allocation2 + $0x770] sm:$0xff]
    %v265 = vld [vmem:[#allocation2 + $0x778] sm:$0xff]
    %v266 = vld [vmem:[#allocation2 + $0x780] sm:$0xff]
    %v267 = vld [vmem:[#allocation2 + $0x788] sm:$0xff]
    %v268 = vld [vmem:[#allocation2 + $0x790] sm:$0xff]
    %v269 = vld [vmem:[#allocation2 + $0x798] sm:$0xff]
    %v270 = vld [vmem:[#allocation2 + $0x7a0] sm:$0xff]
    %v271 = vld [vmem:[#allocation2 + $0x7a8] sm:$0xff]
    %v272 = vld [vmem:[#allocation2 + $0x7b0] sm:$0xff]
    %v273 = vld [vmem:[#allocation2 + $0x7b8] sm:$0xff]
    %v274 = vld [vmem:[#allocation2 + $0x7c0] sm:$0xff]
    %v275 = vld [vmem:[#allocation2 + $0x7c8] sm:$0xff]
    %v276 = vld [vmem:[#allocation2 + $0x7d0] sm:$0xff]
    %v277 = vld [vmem:[#allocation2 + $0x7d8] sm:$0xff]
    %v278 = vld [vmem:[#allocation2 + $0x7e0] sm:$0xff]
    %v279 = vld [vmem:[#allocation2 + $0x7e8] sm:$0xff]
    %v280 = vld [vmem:[#allocation2 + $0x7f0] sm:$0xff]
    %v281 = vld [vmem:[#allocation2 + $0x7f8] sm:$0xff]
    %v282 = vld [vmem:[#allocation2 + $0x800] sm:$0xff]
    %v283 = vld [vmem:[#allocation2 + $0x808] sm:$0xff]
    %v284 = vld [vmem:[#allocation2 + $0x810] sm:$0xff]
    %v285 = vld [vmem:[#allocation2 + $0x818] sm:$0xff]
    %v286 = vld [vmem:[#allocation2 + $0x820] sm:$0xff]
    %v287 = vld [vmem:[#allocation2 + $0x828] sm:$0xff]
    %v288 = vld [vmem:[#allocation2 + $0x830] sm:$0xff]
    %v289 = vld [vmem:[#allocation2 + $0x838] sm:$0xff]
    %v290 = vld [vmem:[#allocation2 + $0x840] sm:$0xff]
    %v291 = vld [vmem:[#allocation2 + $0x848] sm:$0xff]
    %v292 = vld [vmem:[#allocation2 + $0x850] sm:$0xff]
    %v293 = vld [vmem:[#allocation2 + $0x858] sm:$0xff]
    %v294 = vld [vmem:[#allocation2 + $0x860] sm:$0xff]
    %v295 = vld [vmem:[#allocation2 + $0x868] sm:$0xff]
    %v296 = vld [vmem:[#allocation2 + $0x870] sm:$0xff]
    %v297 = vld [vmem:[#allocation2 + $0x878] sm:$0xff]
    %v298 = vld [vmem:[#allocation2 + $0x880] sm:$0xff]
    %v299 = vld [vmem:[#allocation2 + $0x888] sm:$0xff]
    %v300 = vld [vmem:[#allocation2 + $0x890] sm:$0xff]
    %v301 = vld [vmem:[#allocation2 + $0x898] sm:$0xff]
    %v302 = vld [vmem:[#allocation2 + $0x8a0] sm:$0xff]
    %v303 = vld [vmem:[#allocation2 + $0x8a8] sm:$0xff]
    %v304 = vld [vmem:[#allocation2 + $0x8b0] sm:$0xff]
    %v305 = vld [vmem:[#allocation2 + $0x8b8] sm:$0xff]
    %v306 = vld [vmem:[#allocation2 + $0x8c0] sm:$0xff]
    %v307 = vld [vmem:[#allocation2 + $0x8c8] sm:$0xff]
    %v308 = vld [vmem:[#allocation2 + $0x8d0] sm:$0xff]
    %v309 = vld [vmem:[#allocation2 + $0x8d8] sm:$0xff]
    %v310 = vld [vmem:[#allocation2 + $0x8e0] sm:$0xff]
    %v311 = vld [vmem:[#allocation2 + $0x8e8] sm:$0xff]
    %v312 = vld [vmem:[#allocation2 + $0x8f0] sm:$0xff]
    %v313 = vld [vmem:[#allocation2 + $0x8f8] sm:$0xff]
    %v314 = vld [vmem:[#allocation2 + $0x900] sm:$0xff]
    %v315 = vld [vmem:[#allocation2 + $0x908] sm:$0xff]
    %v316 = vld [vmem:[#allocation2 + $0x910] sm:$0xff]
    %v317 = vld [vmem:[#allocation2 + $0x918] sm:$0xff]
    %v318 = vld [vmem:[#allocation2 + $0x920] sm:$0xff]
    %v319 = vld [vmem:[#allocation2 + $0x928] sm:$0xff]
    %v320 = vld [vmem:[#allocation2 + $0x930] sm:$0xff]
    %v321 = vld [vmem:[#allocation2 + $0x938] sm:$0xff]
    %v322 = vld [vmem:[#allocation2 + $0x940] sm:$0xff]
    %v323 = vld [vmem:[#allocation2 + $0x948] sm:$0xff]
    %v324 = vld [vmem:[#allocation2 + $0x950] sm:$0xff]
    %v325 = vld [vmem:[#allocation2 + $0x958] sm:$0xff]
    %v326 = vld [vmem:[#allocation2 + $0x960] sm:$0xff]
    %v327 = vld [vmem:[#allocation2 + $0x968] sm:$0xff]
    %v328 = vld [vmem:[#allocation2 + $0x970] sm:$0xff]
    %v329 = vld [vmem:[#allocation2 + $0x978] sm:$0xff]
    %v330 = vld [vmem:[#allocation2 + $0x980] sm:$0xff]
    %v331 = vld [vmem:[#allocation2 + $0x988] sm:$0xff]
    %v332 = vld [vmem:[#allocation2 + $0x990] sm:$0xff]
    %v333 = vld [vmem:[#allocation2 + $0x998] sm:$0xff]
    %v334 = vld [vmem:[#allocation2 + $0x9a0] sm:$0xff]
    %v335 = vld [vmem:[#allocation2 + $0x9a8] sm:$0xff]
    %v336 = vld [vmem:[#allocation2 + $0x9b0] sm:$0xff]
    %v337 = vld [vmem:[#allocation2 + $0x9b8] sm:$0xff]
    %v338 = vld [vmem:[#allocation2 + $0x9c0] sm:$0xff]
    %v339 = vld [vmem:[#allocation2 + $0x9c8] sm:$0xff]
    %v340 = vld [vmem:[#allocation2 + $0x9d0] sm:$0xff]
    %v341 = vld [vmem:[#allocation2 + $0x9d8] sm:$0xff]
    %v342 = vld [vmem:[#allocation2 + $0x9e0] sm:$0xff]
    %v343 = vld [vmem:[#allocation2 + $0x9e8] sm:$0xff]
    %v344 = vld [vmem:[#allocation2 + $0x9f0] sm:$0xff]
    %v345 = vld [vmem:[#allocation2 + $0x9f8] sm:$0xff]
    %v346 = vld [vmem:[#allocation2 + $0xa00] sm:$0xff]
    %v347 = vld [vmem:[#allocation2 + $0xa08] sm:$0xff]
    %v348 = vld [vmem:[#allocation2 + $0xa10] sm:$0xff]
    %v349 = vld [vmem:[#allocation2 + $0xa18] sm:$0xff]
    %v350 = vld [vmem:[#allocation2 + $0xa20] sm:$0xff]
    %v351 = vld [vmem:[#allocation2 + $0xa28] sm:$0xff]
    %v352 = vld [vmem:[#allocation2 + $0xa30] sm:$0xff]
    %v353 = vld [vmem:[#allocation2 + $0xa38] sm:$0xff]
    %v354 = vld [vmem:[#allocation2 + $0xa40] sm:$0xff]
    %v355 = vld [vmem:[#allocation2 + $0xa48] sm:$0xff]
    %v356 = vld [vmem:[#allocation2 + $0xa50] sm:$0xff]
    %v357 = vld [vmem:[#allocation2 + $0xa58] sm:$0xff]
    %v358 = vld [vmem:[#allocation2 + $0xa60] sm:$0xff]
    %v359 = vld [vmem:[#allocation2 + $0xa68] sm:$0xff]
    %v360 = vld [vmem:[#allocation2 + $0xa70] sm:$0xff]
    %v361 = vld [vmem:[#allocation2 + $0xa78] sm:$0xff]
    %v362 = vld [vmem:[#allocation2 + $0xa80] sm:$0xff]
    %v363 = vld [vmem:[#allocation2 + $0xa88] sm:$0xff]
    %v364 = vld [vmem:[#allocation2 + $0xa90] sm:$0xff]
    %v365 = vld [vmem:[#allocation2 + $0xa98] sm:$0xff]
    %v366 = vld [vmem:[#allocation2 + $0xaa0] sm:$0xff]
    %v367 = vld [vmem:[#allocation2 + $0xaa8] sm:$0xff]
    %v368 = vld [vmem:[#allocation2 + $0xab0] sm:$0xff]
    %v369 = vld [vmem:[#allocation2 + $0xab8] sm:$0xff]
    %v370 = vld [vmem:[#allocation2 + $0xac0] sm:$0xff]
    %v371 = vld [vmem:[#allocation2 + $0xac8] sm:$0xff]
    %v372 = vld [vmem:[#allocation2 + $0xad0] sm:$0xff]
    %v373 = vld [vmem:[#allocation2 + $0xad8] sm:$0xff]
    %v374 = vld [vmem:[#allocation2 + $0xae0] sm:$0xff]
    %v375 = vld [vmem:[#allocation2 + $0xae8] sm:$0xff]
    %v376 = vld [vmem:[#allocation2 + $0xaf0] sm:$0xff]
    %v377 = vld [vmem:[#allocation2 + $0xaf8] sm:$0xff]
    %v378 = vld [vmem:[#allocation2 + $0xb00] sm:$0xff]
    %v379 = vld [vmem:[#allocation2 + $0xb08] sm:$0xff]
    %v380 = vld [vmem:[#allocation2 + $0xb10] sm:$0xff]
    %v381 = vld [vmem:[#allocation2 + $0xb18] sm:$0xff]
    %v382 = vld [vmem:[#allocation2 + $0xb20] sm:$0xff]
    %v383 = vld [vmem:[#allocation2 + $0xb28] sm:$0xff]
    %v384 = vld [vmem:[#allocation2 + $0xb30] sm:$0xff]
    %v385 = vld [vmem:[#allocation2 + $0xb38] sm:$0xff]
    %v386 = vld [vmem:[#allocation2 + $0xb40] sm:$0xff]
    %v387 = vld [vmem:[#allocation2 + $0xb48] sm:$0xff]
    %v388 = vld [vmem:[#allocation2 + $0xb50] sm:$0xff]
    %v389 = vld [vmem:[#allocation2 + $0xb58] sm:$0xff]
    %v390 = vld [vmem:[#allocation2 + $0xb60] sm:$0xff]
    %v391 = vld [vmem:[#allocation2 + $0xb68] sm:$0xff]
    %v392 = vld [vmem:[#allocation2 + $0xb70] sm:$0xff]
    %v393 = vld [vmem:[#allocation2 + $0xb78] sm:$0xff]
    %v394 = vld [vmem:[#allocation2 + $0xb80] sm:$0xff]
    %v395 = vld [vmem:[#allocation2 + $0xb88] sm:$0xff]
    %v396 = vld [vmem:[#allocation2 + $0xb90] sm:$0xff]
    %v397 = vld [vmem:[#allocation2 + $0xb98] sm:$0xff]
    %v398 = vld [vmem:[#allocation2 + $0xba0] sm:$0xff]
    %v399 = vld [vmem:[#allocation2 + $0xba8] sm:$0xff]
    %v400 = vld [vmem:[#allocation2 + $0xbb0] sm:$0xff]
    %v401 = vld [vmem:[#allocation2 + $0xbb8] sm:$0xff]
    %v402 = vld [vmem:[#allocation2 + $0xbc0] sm:$0xff]
    %v403 = vld [vmem:[#allocation2 + $0xbc8] sm:$0xff]
    %v404 = vld [vmem:[#allocation2 + $0xbd0] sm:$0xff]
    %v405 = vld [vmem:[#allocation2 + $0xbd8] sm:$0xff]
    %v406 = vld [vmem:[#allocation2 + $0xbe0] sm:$0xff]
    %v407 = vld [vmem:[#allocation2 + $0xbe8] sm:$0xff]
    %v408 = vld [vmem:[#allocation2 + $0xbf0] sm:$0xff]
    %v409 = vld [vmem:[#allocation2 + $0xbf8] sm:$0xff]
    %v410 = vld [vmem:[#allocation2 + $0xc00] sm:$0xff]
    %v411 = vld [vmem:[#allocation2 + $0xc08] sm:$0xff]
    %v412 = vld [vmem:[#allocation2 + $0xc10] sm:$0xff]
    %v413 = vld [vmem:[#allocation2 + $0xc18] sm:$0xff]
    %v414 = vld [vmem:[#allocation2 + $0xc20] sm:$0xff]
    %v415 = vld [vmem:[#allocation2 + $0xc28] sm:$0xff]
    %v416 = vld [vmem:[#allocation2 + $0xc30] sm:$0xff]
    %v417 = vld [vmem:[#allocation2 + $0xc38] sm:$0xff]
    %v418 = vld [vmem:[#allocation2 + $0xc40] sm:$0xff]
    %v419 = vld [vmem:[#allocation2 + $0xc48] sm:$0xff]
    %v420 = vld [vmem:[#allocation2 + $0xc50] sm:$0xff]
    %v421 = vld [vmem:[#allocation2 + $0xc58] sm:$0xff]
    %v422 = vld [vmem:[#allocation2 + $0xc60] sm:$0xff]
    %v423 = vld [vmem:[#allocation2 + $0xc68] sm:$0xff]
    %v424 = vld [vmem:[#allocation2 + $0xc70] sm:$0xff]
    %v425 = vld [vmem:[#allocation2 + $0xc78] sm:$0xff]
    %v426 = vld [vmem:[#allocation2 + $0xc80] sm:$0xff]
    %v427 = vld [vmem:[#allocation2 + $0xc88] sm:$0xff]
    %v428 = vld [vmem:[#allocation2 + $0xc90] sm:$0xff]
    %v429 = vld [vmem:[#allocation2 + $0xc98] sm:$0xff]
    %v430 = vld [vmem:[#allocation2 + $0xca0] sm:$0xff]
    %v431 = vld [vmem:[#allocation2 + $0xca8] sm:$0xff]
    %v432 = vld [vmem:[#allocation2 + $0xcb0] sm:$0xff]
    %v433 = vld [vmem:[#allocation2 + $0xcb8] sm:$0xff]
    %v434 = vld [vmem:[#allocation2 + $0xcc0] sm:$0xff]
    %v435 = vld [vmem:[#allocation2 + $0xcc8] sm:$0xff]
    %v436 = vld [vmem:[#allocation2 + $0xcd0] sm:$0xff]
    %v437 = vld [vmem:[#allocation2 + $0xcd8] sm:$0xff]
    %v438 = vld [vmem:[#allocation2 + $0xce0] sm:$0xff]
    %v439 = vld [vmem:[#allocation2 + $0xce8] sm:$0xff]
    %v440 = vld [vmem:[#allocation2 + $0xcf0] sm:$0xff]
    %v441 = vld [vmem:[#allocation2 + $0xcf8] sm:$0xff]
    %v442 = vld [vmem:[#allocation2 + $0xd00] sm:$0xff]
    %v443 = vld [vmem:[#allocation2 + $0xd08] sm:$0xff]
    %v444 = vld [vmem:[#allocation2 + $0xd10] sm:$0xff]
    %v445 = vld [vmem:[#allocation2 + $0xd18] sm:$0xff]
    %v446 = vld [vmem:[#allocation2 + $0xd20] sm:$0xff]
    %v447 = vld [vmem:[#allocation2 + $0xd28] sm:$0xff]
    %v448 = vld [vmem:[#allocation2 + $0xd30] sm:$0xff]
    %v449 = vld [vmem:[#allocation2 + $0xd38] sm:$0xff]
    %v450 = vld [vmem:[#allocation2 + $0xd40] sm:$0xff]
    %v451 = vld [vmem:[#allocation2 + $0xd48] sm:$0xff]
    %v452 = vld [vmem:[#allocation2 + $0xd50] sm:$0xff]
    %v453 = vld [vmem:[#allocation2 + $0xd58] sm:$0xff]
    %v454 = vld [vmem:[#allocation2 + $0xd60] sm:$0xff]
    %v455 = vld [vmem:[#allocation2 + $0xd68] sm:$0xff]
    %v456 = vld [vmem:[#allocation2 + $0xd70] sm:$0xff]
    %v457 = vld [vmem:[#allocation2 + $0xd78] sm:$0xff]
    %v458 = vld [vmem:[#allocation2 + $0xd80] sm:$0xff]
    %v459 = vld [vmem:[#allocation2 + $0xd88] sm:$0xff]
    %v460 = vld [vmem:[#allocation2 + $0xd90] sm:$0xff]
    %v461 = vld [vmem:[#allocation2 + $0xd98] sm:$0xff]
    %v462 = vld [vmem:[#allocation2 + $0xda0] sm:$0xff]
    %v463 = vld [vmem:[#allocation2 + $0xda8] sm:$0xff]
    %v464 = vld [vmem:[#allocation2 + $0xdb0] sm:$0xff]
    %v465 = vld [vmem:[#allocation2 + $0xdb8] sm:$0xff]
    %v466 = vld [vmem:[#allocation2 + $0xdc0] sm:$0xff]
    %v467 = vld [vmem:[#allocation2 + $0xdc8] sm:$0xff]
    %v468 = vld [vmem:[#allocation2 + $0xdd0] sm:$0xff]
    %v469 = vld [vmem:[#allocation2 + $0xdd8] sm:$0xff]
    %v470 = vld [vmem:[#allocation2 + $0xde0] sm:$0xff]
    %v471 = vld [vmem:[#allocation2 + $0xde8] sm:$0xff]
    %v472 = vld [vmem:[#allocation2 + $0xdf0] sm:$0xff]
    %v473 = vld [vmem:[#allocation2 + $0xdf8] sm:$0xff]
    %v474 = vld [vmem:[#allocation2 + $0xe00] sm:$0xff]
    %v475 = vld [vmem:[#allocation2 + $0xe08] sm:$0xff]
    %v476 = vld [vmem:[#allocation2 + $0xe10] sm:$0xff]
    %v477 = vld [vmem:[#allocation2 + $0xe18] sm:$0xff]
    %v478 = vld [vmem:[#allocation2 + $0xe20] sm:$0xff]
    %v479 = vld [vmem:[#allocation2 + $0xe28] sm:$0xff]
    %v480 = vld [vmem:[#allocation2 + $0xe30] sm:$0xff]
    %v481 = vld [vmem:[#allocation2 + $0xe38] sm:$0xff]
    %v482 = vld [vmem:[#allocation2 + $0xe40] sm:$0xff]
    %v483 = vld [vmem:[#allocation2 + $0xe48] sm:$0xff]
    %v484 = vld [vmem:[#allocation2 + $0xe50] sm:$0xff]
    %v485 = vld [vmem:[#allocation2 + $0xe58] sm:$0xff]
    %v486 = vld [vmem:[#allocation2 + $0xe60] sm:$0xff]
    %v487 = vld [vmem:[#allocation2 + $0xe68] sm:$0xff]
    %v488 = vld [vmem:[#allocation2 + $0xe70] sm:$0xff]
    %v489 = vld [vmem:[#allocation2 + $0xe78] sm:$0xff]
    %v490 = vld [vmem:[#allocation2 + $0xe80] sm:$0xff]
    %v491 = vld [vmem:[#allocation2 + $0xe88] sm:$0xff]
    %v492 = vld [vmem:[#allocation2 + $0xe90] sm:$0xff]
    %v493 = vld [vmem:[#allocation2 + $0xe98] sm:$0xff]
    %v494 = vld [vmem:[#allocation2 + $0xea0] sm:$0xff]
    %v495 = vld [vmem:[#allocation2 + $0xea8] sm:$0xff]
    %v496 = vld [vmem:[#allocation2 + $0xeb0] sm:$0xff]
    %v497 = vld [vmem:[#allocation2 + $0xeb8] sm:$0xff]
    %v498 = vld [vmem:[#allocation2 + $0xec0] sm:$0xff]
    %v499 = vld [vmem:[#allocation2 + $0xec8] sm:$0xff]
    %v500 = vld [vmem:[#allocation2 + $0xed0] sm:$0xff]
    %v501 = vld [vmem:[#allocation2 + $0xed8] sm:$0xff]
    %v502 = vld [vmem:[#allocation2 + $0xee0] sm:$0xff]
    %v503 = vld [vmem:[#allocation2 + $0xee8] sm:$0xff]
    %v504 = vld [vmem:[#allocation2 + $0xef0] sm:$0xff]
    %v505 = vld [vmem:[#allocation2 + $0xef8] sm:$0xff]
    %v506 = vld [vmem:[#allocation2 + $0xf00] sm:$0xff]
    %v507 = vld [vmem:[#allocation2 + $0xf08] sm:$0xff]
    %v508 = vld [vmem:[#allocation2 + $0xf10] sm:$0xff]
    %v509 = vld [vmem:[#allocation2 + $0xf18] sm:$0xff]
    %v510 = vld [vmem:[#allocation2 + $0xf20] sm:$0xff]
    %v511 = vld [vmem:[#allocation2 + $0xf28] sm:$0xff]
    %v512 = vld [vmem:[#allocation2 + $0xf30] sm:$0xff]
    %v513 = vld [vmem:[#allocation2 + $0xf38] sm:$0xff]
    %v514 = vld [vmem:[#allocation2 + $0xf40] sm:$0xff]
    %v515 = vld [vmem:[#allocation2 + $0xf48] sm:$0xff]
    %v516 = vld [vmem:[#allocation2 + $0xf50] sm:$0xff]
    %v517 = vld [vmem:[#allocation2 + $0xf58] sm:$0xff]
    %v518 = vld [vmem:[#allocation2 + $0xf60] sm:$0xff]
    %v519 = vld [vmem:[#allocation2 + $0xf68] sm:$0xff]
    %v520 = vld [vmem:[#allocation2 + $0xf70] sm:$0xff]
    %v521 = vld [vmem:[#allocation2 + $0xf78] sm:$0xff]
    %v522 = vld [vmem:[#allocation2 + $0xf80] sm:$0xff]
    %v523 = vld [vmem:[#allocation2 + $0xf88] sm:$0xff]
    %v524 = vld [vmem:[#allocation2 + $0xf90] sm:$0xff]
    %v525 = vld [vmem:[#allocation2 + $0xf98] sm:$0xff]
    %v526 = vld [vmem:[#allocation2 + $0xfa0] sm:$0xff]
    %v527 = vld [vmem:[#allocation2 + $0xfa8] sm:$0xff]
    %v528 = vld [vmem:[#allocation2 + $0xfb0] sm:$0xff]
    %v529 = vld [vmem:[#allocation2 + $0xfb8] sm:$0xff]
    %v530 = vld [vmem:[#allocation2 + $0xfc0] sm:$0xff]
    %v531 = vld [vmem:[#allocation2 + $0xfc8] sm:$0xff]
    %v532 = vld [vmem:[#allocation2 + $0xfd0] sm:$0xff]
    %v533 = vld [vmem:[#allocation2 + $0xfd8] sm:$0xff]
    %v534 = vld [vmem:[#allocation2 + $0xfe0] sm:$0xff]
    %v535 = vld [vmem:[#allocation2 + $0xfe8] sm:$0xff]
    %v536 = vld [vmem:[#allocation2 + $0xff0] sm:$0xff]
    %v537 = vld [vmem:[#allocation2 + $0xff8] sm:$0xff]
    %v539 = vunpack.c.l.b16 %v25
    %v540 = vunpack.c.h.b16 %v25
    %v541 = vpack.c.b16 %v539, %v539
    %v542 = vpack.c.b16 %v540, %v540
    %v1057 = vunpack.c.l.b16 %v26
    %v1058 = vunpack.c.h.b16 %v26
    %v1059 = vunpack.c.l.b16 %v27
    %v1060 = vunpack.c.h.b16 %v27
    %v1061 = vunpack.c.l.b16 %v28
    %v1062 = vunpack.c.h.b16 %v28
    %v1063 = vunpack.c.l.b16 %v29
    %v1064 = vunpack.c.h.b16 %v29
    %v1065 = vunpack.c.l.b16 %v30
    %v1066 = vunpack.c.h.b16 %v30
    %v1067 = vunpack.c.l.b16 %v31
    %v1068 = vunpack.c.h.b16 %v31
    %v1069 = vunpack.c.l.b16 %v32
    %v1070 = vunpack.c.h.b16 %v32
    %v1071 = vunpack.c.l.b16 %v33
    %v1072 = vunpack.c.h.b16 %v33
    %v1073 = vunpack.c.l.b16 %v34
    %v1074 = vunpack.c.h.b16 %v34
    %v1075 = vunpack.c.l.b16 %v35
    %v1076 = vunpack.c.h.b16 %v35
    %v1077 = vunpack.c.l.b16 %v36
    %v1078 = vunpack.c.h.b16 %v36
    %v1079 = vunpack.c.l.b16 %v37
    %v1080 = vunpack.c.h.b16 %v37
    %v1081 = vunpack.c.l.b16 %v38
    %v1082 = vunpack.c.h.b16 %v38
    %v1083 = vunpack.c.l.b16 %v39
    %v1084 = vunpack.c.h.b16 %v39
    %v1085 = vunpack.c.l.b16 %v40
    %v1086 = vunpack.c.h.b16 %v40
    %v1087 = vunpack.c.l.b16 %v41
    %v1088 = vunpack.c.h.b16 %v41
    %v1089 = vunpack.c.l.b16 %v42
    %v1090 = vunpack.c.h.b16 %v42
    %v1091 = vunpack.c.l.b16 %v43
    %v1092 = vunpack.c.h.b16 %v43
    %v1093 = vunpack.c.l.b16 %v44
    %v1094 = vunpack.c.h.b16 %v44
    %v1095 = vunpack.c.l.b16 %v45
    %v1096 = vunpack.c.h.b16 %v45
    %v1097 = vunpack.c.l.b16 %v46
    %v1098 = vunpack.c.h.b16 %v46
    %v1099 = vunpack.c.l.b16 %v47
    %v1100 = vunpack.c.h.b16 %v47
    %v1101 = vunpack.c.l.b16 %v48
    %v1102 = vunpack.c.h.b16 %v48
    %v1103 = vunpack.c.l.b16 %v49
    %v1104 = vunpack.c.h.b16 %v49
    %v1105 = vunpack.c.l.b16 %v50
    %v1106 = vunpack.c.h.b16 %v50
    %v1107 = vunpack.c.l.b16 %v51
    %v1108 = vunpack.c.h.b16 %v51
    %v1109 = vunpack.c.l.b16 %v52
    %v1110 = vunpack.c.h.b16 %v52
    %v1111 = vunpack.c.l.b16 %v53
    %v1112 = vunpack.c.h.b16 %v53
    %v1113 = vunpack.c.l.b16 %v54
    %v1114 = vunpack.c.h.b16 %v54
    %v1115 = vunpack.c.l.b16 %v55
    %v1116 = vunpack.c.h.b16 %v55
    %v1117 = vunpack.c.l.b16 %v56
    %v1118 = vunpack.c.h.b16 %v56
    %v1119 = vunpack.c.l.b16 %v57
    %v1120 = vunpack.c.h.b16 %v57
    %v1121 = vunpack.c.l.b16 %v58
    %v1122 = vunpack.c.h.b16 %v58
    %v1123 = vunpack.c.l.b16 %v59
    %v1124 = vunpack.c.h.b16 %v59
    %v1125 = vunpack.c.l.b16 %v60
    %v1126 = vunpack.c.h.b16 %v60
    %v1127 = vunpack.c.l.b16 %v61
    %v1128 = vunpack.c.h.b16 %v61
    %v1129 = vunpack.c.l.b16 %v62
    %v1130 = vunpack.c.h.b16 %v62
    %v1131 = vunpack.c.l.b16 %v63
    %v1132 = vunpack.c.h.b16 %v63
    %v1133 = vunpack.c.l.b16 %v64
    %v1134 = vunpack.c.h.b16 %v64
    %v1135 = vunpack.c.l.b16 %v65
    %v1136 = vunpack.c.h.b16 %v65
    %v1137 = vunpack.c.l.b16 %v66
    %v1138 = vunpack.c.h.b16 %v66
    %v1139 = vunpack.c.l.b16 %v67
    %v1140 = vunpack.c.h.b16 %v67
    %v1141 = vunpack.c.l.b16 %v68
    %v1142 = vunpack.c.h.b16 %v68
    %v1143 = vunpack.c.l.b16 %v69
    %v1144 = vunpack.c.h.b16 %v69
    %v1145 = vunpack.c.l.b16 %v70
    %v1146 = vunpack.c.h.b16 %v70
    %v1147 = vunpack.c.l.b16 %v71
    %v1148 = vunpack.c.h.b16 %v71
    %v1149 = vunpack.c.l.b16 %v72
    %v1150 = vunpack.c.h.b16 %v72
    %v1151 = vunpack.c.l.b16 %v73
    %v1152 = vunpack.c.h.b16 %v73
    %v1153 = vunpack.c.l.b16 %v74
    %v1154 = vunpack.c.h.b16 %v74
    %v1155 = vunpack.c.l.b16 %v75
    %v1156 = vunpack.c.h.b16 %v75
    %v1157 = vunpack.c.l.b16 %v76
    %v1158 = vunpack.c.h.b16 %v76
    %v1159 = vunpack.c.l.b16 %v77
    %v1160 = vunpack.c.h.b16 %v77
    %v1161 = vunpack.c.l.b16 %v78
    %v1162 = vunpack.c.h.b16 %v78
    %v1163 = vunpack.c.l.b16 %v79
    %v1164 = vunpack.c.h.b16 %v79
    %v1165 = vunpack.c.l.b16 %v80
    %v1166 = vunpack.c.h.b16 %v80
    %v1167 = vunpack.c.l.b16 %v81
    %v1168 = vunpack.c.h.b16 %v81
    %v1169 = vunpack.c.l.b16 %v82
    %v1170 = vunpack.c.h.b16 %v82
    %v1171 = vunpack.c.l.b16 %v83
    %v1172 = vunpack.c.h.b16 %v83
    %v1173 = vunpack.c.l.b16 %v84
    %v1174 = vunpack.c.h.b16 %v84
    %v1175 = vunpack.c.l.b16 %v85
    %v1176 = vunpack.c.h.b16 %v85
    %v1177 = vunpack.c.l.b16 %v86
    %v1178 = vunpack.c.h.b16 %v86
    %v1179 = vunpack.c.l.b16 %v87
    %v1180 = vunpack.c.h.b16 %v87
    %v1181 = vunpack.c.l.b16 %v88
    %v1182 = vunpack.c.h.b16 %v88
    %v1183 = vunpack.c.l.b16 %v89
    %v1184 = vunpack.c.h.b16 %v89
    %v1185 = vunpack.c.l.b16 %v90
    %v1186 = vunpack.c.h.b16 %v90
    %v1187 = vunpack.c.l.b16 %v91
    %v1188 = vunpack.c.h.b16 %v91
    %v1189 = vunpack.c.l.b16 %v92
    %v1190 = vunpack.c.h.b16 %v92
    %v1191 = vunpack.c.l.b16 %v93
    %v1192 = vunpack.c.h.b16 %v93
    %v1193 = vunpack.c.l.b16 %v94
    %v1194 = vunpack.c.h.b16 %v94
    %v1195 = vunpack.c.l.b16 %v95
    %v1196 = vunpack.c.h.b16 %v95
    %v1197 = vunpack.c.l.b16 %v96
    %v1198 = vunpack.c.h.b16 %v96
    %v1199 = vunpack.c.l.b16 %v97
    %v1200 = vunpack.c.h.b16 %v97
    %v1201 = vunpack.c.l.b16 %v98
    %v1202 = vunpack.c.h.b16 %v98
    %v1203 = vunpack.c.l.b16 %v99
    %v1204 = vunpack.c.h.b16 %v99
    %v1205 = vunpack.c.l.b16 %v100
    %v1206 = vunpack.c.h.b16 %v100
    %v1207 = vunpack.c.l.b16 %v101
    %v1208 = vunpack.c.h.b16 %v101
    %v1209 = vunpack.c.l.b16 %v102
    %v1210 = vunpack.c.h.b16 %v102
    %v1211 = vunpack.c.l.b16 %v103
    %v1212 = vunpack.c.h.b16 %v103
    %v1213 = vunpack.c.l.b16 %v104
    %v1214 = vunpack.c.h.b16 %v104
    %v1215 = vunpack.c.l.b16 %v105
    %v1216 = vunpack.c.h.b16 %v105
    %v1217 = vunpack.c.l.b16 %v106
    %v1218 = vunpack.c.h.b16 %v106
    %v1219 = vunpack.c.l.b16 %v107
    %v1220 = vunpack.c.h.b16 %v107
    %v1221 = vunpack.c.l.b16 %v108
    %v1222 = vunpack.c.h.b16 %v108
    %v1223 = vunpack.c.l.b16 %v109
    %v1224 = vunpack.c.h.b16 %v109
    %v1225 = vunpack.c.l.b16 %v110
    %v1226 = vunpack.c.h.b16 %v110
    %v1227 = vunpack.c.l.b16 %v111
    %v1228 = vunpack.c.h.b16 %v111
    %v1229 = vunpack.c.l.b16 %v112
    %v1230 = vunpack.c.h.b16 %v112
    %v1231 = vunpack.c.l.b16 %v113
    %v1232 = vunpack.c.h.b16 %v113
    %v1233 = vunpack.c.l.b16 %v114
    %v1234 = vunpack.c.h.b16 %v114
    %v1235 = vunpack.c.l.b16 %v115
    %v1236 = vunpack.c.h.b16 %v115
    %v1237 = vunpack.c.l.b16 %v116
    %v1238 = vunpack.c.h.b16 %v116
    %v1239 = vunpack.c.l.b16 %v117
    %v1240 = vunpack.c.h.b16 %v117
    %v1241 = vunpack.c.l.b16 %v118
    %v1242 = vunpack.c.h.b16 %v118
    %v1243 = vunpack.c.l.b16 %v119
    %v1244 = vunpack.c.h.b16 %v119
    %v1245 = vunpack.c.l.b16 %v120
    %v1246 = vunpack.c.h.b16 %v120
    %v1247 = vunpack.c.l.b16 %v121
    %v1248 = vunpack.c.h.b16 %v121
    %v1249 = vunpack.c.l.b16 %v122
    %v1250 = vunpack.c.h.b16 %v122
    %v1251 = vunpack.c.l.b16 %v123
    %v1252 = vunpack.c.h.b16 %v123
    %v1253 = vunpack.c.l.b16 %v124
    %v1254 = vunpack.c.h.b16 %v124
    %v1255 = vunpack.c.l.b16 %v125
    %v1256 = vunpack.c.h.b16 %v125
    %v1257 = vunpack.c.l.b16 %v126
    %v1258 = vunpack.c.h.b16 %v126
    %v1259 = vunpack.c.l.b16 %v127
    %v1260 = vunpack.c.h.b16 %v127
    %v1261 = vunpack.c.l.b16 %v128
    %v1262 = vunpack.c.h.b16 %v128
    %v1263 = vunpack.c.l.b16 %v129
    %v1264 = vunpack.c.h.b16 %v129
    %v1265 = vunpack.c.l.b16 %v130
    %v1266 = vunpack.c.h.b16 %v130
    %v1267 = vunpack.c.l.b16 %v131
    %v1268 = vunpack.c.h.b16 %v131
    %v1269 = vunpack.c.l.b16 %v132
    %v1270 = vunpack.c.h.b16 %v132
    %v1271 = vunpack.c.l.b16 %v133
    %v1272 = vunpack.c.h.b16 %v133
    %v1273 = vunpack.c.l.b16 %v134
    %v1274 = vunpack.c.h.b16 %v134
    %v1275 = vunpack.c.l.b16 %v135
    %v1276 = vunpack.c.h.b16 %v135
    %v1277 = vunpack.c.l.b16 %v136
    %v1278 = vunpack.c.h.b16 %v136
    %v1279 = vunpack.c.l.b16 %v137
    %v1280 = vunpack.c.h.b16 %v137
    %v1281 = vunpack.c.l.b16 %v138
    %v1282 = vunpack.c.h.b16 %v138
    %v1283 = vunpack.c.l.b16 %v139
    %v1284 = vunpack.c.h.b16 %v139
    %v1285 = vunpack.c.l.b16 %v140
    %v1286 = vunpack.c.h.b16 %v140
    %v1287 = vunpack.c.l.b16 %v141
    %v1288 = vunpack.c.h.b16 %v141
    %v1289 = vunpack.c.l.b16 %v142
    %v1290 = vunpack.c.h.b16 %v142
    %v1291 = vunpack.c.l.b16 %v143
    %v1292 = vunpack.c.h.b16 %v143
    %v1293 = vunpack.c.l.b16 %v144
    %v1294 = vunpack.c.h.b16 %v144
    %v1295 = vunpack.c.l.b16 %v145
    %v1296 = vunpack.c.h.b16 %v145
    %v1297 = vunpack.c.l.b16 %v146
    %v1298 = vunpack.c.h.b16 %v146
    %v1299 = vunpack.c.l.b16 %v147
    %v1300 = vunpack.c.h.b16 %v147
    %v1301 = vunpack.c.l.b16 %v148
    %v1302 = vunpack.c.h.b16 %v148
    %v1303 = vunpack.c.l.b16 %v149
    %v1304 = vunpack.c.h.b16 %v149
    %v1305 = vunpack.c.l.b16 %v150
    %v1306 = vunpack.c.h.b16 %v150
    %v1307 = vunpack.c.l.b16 %v151
    %v1308 = vunpack.c.h.b16 %v151
    %v1309 = vunpack.c.l.b16 %v152
    %v1310 = vunpack.c.h.b16 %v152
    %v1311 = vunpack.c.l.b16 %v153
    %v1312 = vunpack.c.h.b16 %v153
    %v1313 = vunpack.c.l.b16 %v154
    %v1314 = vunpack.c.h.b16 %v154
    %v1315 = vunpack.c.l.b16 %v155
    %v1316 = vunpack.c.h.b16 %v155
    %v1317 = vunpack.c.l.b16 %v156
    %v1318 = vunpack.c.h.b16 %v156
    %v1319 = vunpack.c.l.b16 %v157
    %v1320 = vunpack.c.h.b16 %v157
    %v1321 = vunpack.c.l.b16 %v158
    %v1322 = vunpack.c.h.b16 %v158
    %v1323 = vunpack.c.l.b16 %v159
    %v1324 = vunpack.c.h.b16 %v159
    %v1325 = vunpack.c.l.b16 %v160
    %v1326 = vunpack.c.h.b16 %v160
    %v1327 = vunpack.c.l.b16 %v161
    %v1328 = vunpack.c.h.b16 %v161
    %v1329 = vunpack.c.l.b16 %v162
    %v1330 = vunpack.c.h.b16 %v162
    %v1331 = vunpack.c.l.b16 %v163
    %v1332 = vunpack.c.h.b16 %v163
    %v1333 = vunpack.c.l.b16 %v164
    %v1334 = vunpack.c.h.b16 %v164
    %v1335 = vunpack.c.l.b16 %v165
    %v1336 = vunpack.c.h.b16 %v165
    %v1337 = vunpack.c.l.b16 %v166
    %v1338 = vunpack.c.h.b16 %v166
    %v1339 = vunpack.c.l.b16 %v167
    %v1340 = vunpack.c.h.b16 %v167
    %v1341 = vunpack.c.l.b16 %v168
    %v1342 = vunpack.c.h.b16 %v168
    %v1343 = vunpack.c.l.b16 %v169
    %v1344 = vunpack.c.h.b16 %v169
    %v1345 = vunpack.c.l.b16 %v170
    %v1346 = vunpack.c.h.b16 %v170
    %v1347 = vunpack.c.l.b16 %v171
    %v1348 = vunpack.c.h.b16 %v171
    %v1349 = vunpack.c.l.b16 %v172
    %v1350 = vunpack.c.h.b16 %v172
    %v1351 = vunpack.c.l.b16 %v173
    %v1352 = vunpack.c.h.b16 %v173
    %v1353 = vunpack.c.l.b16 %v174
    %v1354 = vunpack.c.h.b16 %v174
    %v1355 = vunpack.c.l.b16 %v175
    %v1356 = vunpack.c.h.b16 %v175
    %v1357 = vunpack.c.l.b16 %v176
    %v1358 = vunpack.c.h.b16 %v176
    %v1359 = vunpack.c.l.b16 %v177
    %v1360 = vunpack.c.h.b16 %v177
    %v1361 = vunpack.c.l.b16 %v178
    %v1362 = vunpack.c.h.b16 %v178
    %v1363 = vunpack.c.l.b16 %v179
    %v1364 = vunpack.c.h.b16 %v179
    %v1365 = vunpack.c.l.b16 %v180
    %v1366 = vunpack.c.h.b16 %v180
    %v1367 = vunpack.c.l.b16 %v181
    %v1368 = vunpack.c.h.b16 %v181
    %v1369 = vunpack.c.l.b16 %v182
    %v1370 = vunpack.c.h.b16 %v182
    %v1371 = vunpack.c.l.b16 %v183
    %v1372 = vunpack.c.h.b16 %v183
    %v1373 = vunpack.c.l.b16 %v184
    %v1374 = vunpack.c.h.b16 %v184
    %v1375 = vunpack.c.l.b16 %v185
    %v1376 = vunpack.c.h.b16 %v185
    %v1377 = vunpack.c.l.b16 %v186
    %v1378 = vunpack.c.h.b16 %v186
    %v1379 = vunpack.c.l.b16 %v187
    %v1380 = vunpack.c.h.b16 %v187
    %v1381 = vunpack.c.l.b16 %v188
    %v1382 = vunpack.c.h.b16 %v188
    %v1383 = vunpack.c.l.b16 %v189
    %v1384 = vunpack.c.h.b16 %v189
    %v1385 = vunpack.c.l.b16 %v190
    %v1386 = vunpack.c.h.b16 %v190
    %v1387 = vunpack.c.l.b16 %v191
    %v1388 = vunpack.c.h.b16 %v191
    %v1389 = vunpack.c.l.b16 %v192
    %v1390 = vunpack.c.h.b16 %v192
    %v1391 = vunpack.c.l.b16 %v193
    %v1392 = vunpack.c.h.b16 %v193
    %v1393 = vunpack.c.l.b16 %v194
    %v1394 = vunpack.c.h.b16 %v194
    %v1395 = vunpack.c.l.b16 %v195
    %v1396 = vunpack.c.h.b16 %v195
    %v1397 = vunpack.c.l.b16 %v196
    %v1398 = vunpack.c.h.b16 %v196
    %v1399 = vunpack.c.l.b16 %v197
    %v1400 = vunpack.c.h.b16 %v197
    %v1401 = vunpack.c.l.b16 %v198
    %v1402 = vunpack.c.h.b16 %v198
    %v1403 = vunpack.c.l.b16 %v199
    %v1404 = vunpack.c.h.b16 %v199
    %v1405 = vunpack.c.l.b16 %v200
    %v1406 = vunpack.c.h.b16 %v200
    %v1407 = vunpack.c.l.b16 %v201
    %v1408 = vunpack.c.h.b16 %v201
    %v1409 = vunpack.c.l.b16 %v202
    %v1410 = vunpack.c.h.b16 %v202
    %v1411 = vunpack.c.l.b16 %v203
    %v1412 = vunpack.c.h.b16 %v203
    %v1413 = vunpack.c.l.b16 %v204
    %v1414 = vunpack.c.h.b16 %v204
    %v1415 = vunpack.c.l.b16 %v205
    %v1416 = vunpack.c.h.b16 %v205
    %v1417 = vunpack.c.l.b16 %v206
    %v1418 = vunpack.c.h.b16 %v206
    %v1419 = vunpack.c.l.b16 %v207
    %v1420 = vunpack.c.h.b16 %v207
    %v1421 = vunpack.c.l.b16 %v208
    %v1422 = vunpack.c.h.b16 %v208
    %v1423 = vunpack.c.l.b16 %v209
    %v1424 = vunpack.c.h.b16 %v209
    %v1425 = vunpack.c.l.b16 %v210
    %v1426 = vunpack.c.h.b16 %v210
    %v1427 = vunpack.c.l.b16 %v211
    %v1428 = vunpack.c.h.b16 %v211
    %v1429 = vunpack.c.l.b16 %v212
    %v1430 = vunpack.c.h.b16 %v212
    %v1431 = vunpack.c.l.b16 %v213
    %v1432 = vunpack.c.h.b16 %v213
    %v1433 = vunpack.c.l.b16 %v214
    %v1434 = vunpack.c.h.b16 %v214
    %v1435 = vunpack.c.l.b16 %v215
    %v1436 = vunpack.c.h.b16 %v215
    %v1437 = vunpack.c.l.b16 %v216
    %v1438 = vunpack.c.h.b16 %v216
    %v1439 = vunpack.c.l.b16 %v217
    %v1440 = vunpack.c.h.b16 %v217
    %v1441 = vunpack.c.l.b16 %v218
    %v1442 = vunpack.c.h.b16 %v218
    %v1443 = vunpack.c.l.b16 %v219
    %v1444 = vunpack.c.h.b16 %v219
    %v1445 = vunpack.c.l.b16 %v220
    %v1446 = vunpack.c.h.b16 %v220
    %v1447 = vunpack.c.l.b16 %v221
    %v1448 = vunpack.c.h.b16 %v221
    %v1449 = vunpack.c.l.b16 %v222
    %v1450 = vunpack.c.h.b16 %v222
    %v1451 = vunpack.c.l.b16 %v223
    %v1452 = vunpack.c.h.b16 %v223
    %v1453 = vunpack.c.l.b16 %v224
    %v1454 = vunpack.c.h.b16 %v224
    %v1455 = vunpack.c.l.b16 %v225
    %v1456 = vunpack.c.h.b16 %v225
    %v1457 = vunpack.c.l.b16 %v226
    %v1458 = vunpack.c.h.b16 %v226
    %v1459 = vunpack.c.l.b16 %v227
    %v1460 = vunpack.c.h.b16 %v227
    %v1461 = vunpack.c.l.b16 %v228
    %v1462 = vunpack.c.h.b16 %v228
    %v1463 = vunpack.c.l.b16 %v229
    %v1464 = vunpack.c.h.b16 %v229
    %v1465 = vunpack.c.l.b16 %v230
    %v1466 = vunpack.c.h.b16 %v230
    %v1467 = vunpack.c.l.b16 %v231
    %v1468 = vunpack.c.h.b16 %v231
    %v1469 = vunpack.c.l.b16 %v232
    %v1470 = vunpack.c.h.b16 %v232
    %v1471 = vunpack.c.l.b16 %v233
    %v1472 = vunpack.c.h.b16 %v233
    %v1473 = vunpack.c.l.b16 %v234
    %v1474 = vunpack.c.h.b16 %v234
    %v1475 = vunpack.c.l.b16 %v235
    %v1476 = vunpack.c.h.b16 %v235
    %v1477 = vunpack.c.l.b16 %v236
    %v1478 = vunpack.c.h.b16 %v236
    %v1479 = vunpack.c.l.b16 %v237
    %v1480 = vunpack.c.h.b16 %v237
    %v1481 = vunpack.c.l.b16 %v238
    %v1482 = vunpack.c.h.b16 %v238
    %v1483 = vunpack.c.l.b16 %v239
    %v1484 = vunpack.c.h.b16 %v239
    %v1485 = vunpack.c.l.b16 %v240
    %v1486 = vunpack.c.h.b16 %v240
    %v1487 = vunpack.c.l.b16 %v241
    %v1488 = vunpack.c.h.b16 %v241
    %v1489 = vunpack.c.l.b16 %v242
    %v1490 = vunpack.c.h.b16 %v242
    %v1491 = vunpack.c.l.b16 %v243
    %v1492 = vunpack.c.h.b16 %v243
    %v1493 = vunpack.c.l.b16 %v244
    %v1494 = vunpack.c.h.b16 %v244
    %v1495 = vunpack.c.l.b16 %v245
    %v1496 = vunpack.c.h.b16 %v245
    %v1497 = vunpack.c.l.b16 %v246
    %v1498 = vunpack.c.h.b16 %v246
    %v1499 = vunpack.c.l.b16 %v247
    %v1500 = vunpack.c.h.b16 %v247
    %v1501 = vunpack.c.l.b16 %v248
    %v1502 = vunpack.c.h.b16 %v248
    %v1503 = vunpack.c.l.b16 %v249
    %v1504 = vunpack.c.h.b16 %v249
    %v1505 = vunpack.c.l.b16 %v250
    %v1506 = vunpack.c.h.b16 %v250
    %v1507 = vunpack.c.l.b16 %v251
    %v1508 = vunpack.c.h.b16 %v251
    %v1509 = vunpack.c.l.b16 %v252
    %v1510 = vunpack.c.h.b16 %v252
    %v1511 = vunpack.c.l.b16 %v253
    %v1512 = vunpack.c.h.b16 %v253
    %v1513 = vunpack.c.l.b16 %v254
    %v1514 = vunpack.c.h.b16 %v254
    %v1515 = vunpack.c.l.b16 %v255
    %v1516 = vunpack.c.h.b16 %v255
    %v1517 = vunpack.c.l.b16 %v256
    %v1518 = vunpack.c.h.b16 %v256
    %v1519 = vunpack.c.l.b16 %v257
    %v1520 = vunpack.c.h.b16 %v257
    %v1521 = vunpack.c.l.b16 %v258
    %v1522 = vunpack.c.h.b16 %v258
    %v1523 = vunpack.c.l.b16 %v259
    %v1524 = vunpack.c.h.b16 %v259
    %v1525 = vunpack.c.l.b16 %v260
    %v1526 = vunpack.c.h.b16 %v260
    %v1527 = vunpack.c.l.b16 %v261
    %v1528 = vunpack.c.h.b16 %v261
    %v1529 = vunpack.c.l.b16 %v262
    %v1530 = vunpack.c.h.b16 %v262
    %v1531 = vunpack.c.l.b16 %v263
    %v1532 = vunpack.c.h.b16 %v263
    %v1533 = vunpack.c.l.b16 %v264
    %v1534 = vunpack.c.h.b16 %v264
    %v1535 = vunpack.c.l.b16 %v265
    %v1536 = vunpack.c.h.b16 %v265
    %v1537 = vunpack.c.l.b16 %v266
    %v1538 = vunpack.c.h.b16 %v266
    %v1539 = vunpack.c.l.b16 %v267
    %v1540 = vunpack.c.h.b16 %v267
    %v1541 = vunpack.c.l.b16 %v268
    %v1542 = vunpack.c.h.b16 %v268
    %v1543 = vunpack.c.l.b16 %v269
    %v1544 = vunpack.c.h.b16 %v269
    %v1545 = vunpack.c.l.b16 %v270
    %v1546 = vunpack.c.h.b16 %v270
    %v1547 = vunpack.c.l.b16 %v271
    %v1548 = vunpack.c.h.b16 %v271
    %v1549 = vunpack.c.l.b16 %v272
    %v1550 = vunpack.c.h.b16 %v272
    %v1551 = vunpack.c.l.b16 %v273
    %v1552 = vunpack.c.h.b16 %v273
    %v1553 = vunpack.c.l.b16 %v274
    %v1554 = vunpack.c.h.b16 %v274
    %v1555 = vunpack.c.l.b16 %v275
    %v1556 = vunpack.c.h.b16 %v275
    %v1557 = vunpack.c.l.b16 %v276
    %v1558 = vunpack.c.h.b16 %v276
    %v1559 = vunpack.c.l.b16 %v277
    %v1560 = vunpack.c.h.b16 %v277
    %v1561 = vunpack.c.l.b16 %v278
    %v1562 = vunpack.c.h.b16 %v278
    %v1563 = vunpack.c.l.b16 %v279
    %v1564 = vunpack.c.h.b16 %v279
    %v1565 = vunpack.c.l.b16 %v280
    %v1566 = vunpack.c.h.b16 %v280
    %v1567 = vunpack.c.l.b16 %v281
    %v1568 = vunpack.c.h.b16 %v281
    %v1569 = vunpack.c.l.b16 %v282
    %v1570 = vunpack.c.h.b16 %v282
    %v1571 = vunpack.c.l.b16 %v283
    %v1572 = vunpack.c.h.b16 %v283
    %v1573 = vunpack.c.l.b16 %v284
    %v1574 = vunpack.c.h.b16 %v284
    %v1575 = vunpack.c.l.b16 %v285
    %v1576 = vunpack.c.h.b16 %v285
    %v1577 = vunpack.c.l.b16 %v286
    %v1578 = vunpack.c.h.b16 %v286
    %v1579 = vunpack.c.l.b16 %v287
    %v1580 = vunpack.c.h.b16 %v287
    %v1581 = vunpack.c.l.b16 %v288
    %v1582 = vunpack.c.h.b16 %v288
    %v1583 = vunpack.c.l.b16 %v289
    %v1584 = vunpack.c.h.b16 %v289
    %v1585 = vunpack.c.l.b16 %v290
    %v1586 = vunpack.c.h.b16 %v290
    %v1587 = vunpack.c.l.b16 %v291
    %v1588 = vunpack.c.h.b16 %v291
    %v1589 = vunpack.c.l.b16 %v292
    %v1590 = vunpack.c.h.b16 %v292
    %v1591 = vunpack.c.l.b16 %v293
    %v1592 = vunpack.c.h.b16 %v293
    %v1593 = vunpack.c.l.b16 %v294
    %v1594 = vunpack.c.h.b16 %v294
    %v1595 = vunpack.c.l.b16 %v295
    %v1596 = vunpack.c.h.b16 %v295
    %v1597 = vunpack.c.l.b16 %v296
    %v1598 = vunpack.c.h.b16 %v296
    %v1599 = vunpack.c.l.b16 %v297
    %v1600 = vunpack.c.h.b16 %v297
    %v1601 = vunpack.c.l.b16 %v298
    %v1602 = vunpack.c.h.b16 %v298
    %v1603 = vunpack.c.l.b16 %v299
    %v1604 = vunpack.c.h.b16 %v299
    %v1605 = vunpack.c.l.b16 %v300
    %v1606 = vunpack.c.h.b16 %v300
    %v1607 = vunpack.c.l.b16 %v301
    %v1608 = vunpack.c.h.b16 %v301
    %v1609 = vunpack.c.l.b16 %v302
    %v1610 = vunpack.c.h.b16 %v302
    %v1611 = vunpack.c.l.b16 %v303
    %v1612 = vunpack.c.h.b16 %v303
    %v1613 = vunpack.c.l.b16 %v304
    %v1614 = vunpack.c.h.b16 %v304
    %v1615 = vunpack.c.l.b16 %v305
    %v1616 = vunpack.c.h.b16 %v305
    %v1617 = vunpack.c.l.b16 %v306
    %v1618 = vunpack.c.h.b16 %v306
    %v1619 = vunpack.c.l.b16 %v307
    %v1620 = vunpack.c.h.b16 %v307
    %v1621 = vunpack.c.l.b16 %v308
    %v1622 = vunpack.c.h.b16 %v308
    %v1623 = vunpack.c.l.b16 %v309
    %v1624 = vunpack.c.h.b16 %v309
    %v1625 = vunpack.c.l.b16 %v310
    %v1626 = vunpack.c.h.b16 %v310
    %v1627 = vunpack.c.l.b16 %v311
    %v1628 = vunpack.c.h.b16 %v311
    %v1629 = vunpack.c.l.b16 %v312
    %v1630 = vunpack.c.h.b16 %v312
    %v1631 = vunpack.c.l.b16 %v313
    %v1632 = vunpack.c.h.b16 %v313
    %v1633 = vunpack.c.l.b16 %v314
    %v1634 = vunpack.c.h.b16 %v314
    %v1635 = vunpack.c.l.b16 %v315
    %v1636 = vunpack.c.h.b16 %v315
    %v1637 = vunpack.c.l.b16 %v316
    %v1638 = vunpack.c.h.b16 %v316
    %v1639 = vunpack.c.l.b16 %v317
    %v1640 = vunpack.c.h.b16 %v317
    %v1641 = vunpack.c.l.b16 %v318
    %v1642 = vunpack.c.h.b16 %v318
    %v1643 = vunpack.c.l.b16 %v319
    %v1644 = vunpack.c.h.b16 %v319
    %v1645 = vunpack.c.l.b16 %v320
    %v1646 = vunpack.c.h.b16 %v320
    %v1647 = vunpack.c.l.b16 %v321
    %v1648 = vunpack.c.h.b16 %v321
    %v1649 = vunpack.c.l.b16 %v322
    %v1650 = vunpack.c.h.b16 %v322
    %v1651 = vunpack.c.l.b16 %v323
    %v1652 = vunpack.c.h.b16 %v323
    %v1653 = vunpack.c.l.b16 %v324
    %v1654 = vunpack.c.h.b16 %v324
    %v1655 = vunpack.c.l.b16 %v325
    %v1656 = vunpack.c.h.b16 %v325
    %v1657 = vunpack.c.l.b16 %v326
    %v1658 = vunpack.c.h.b16 %v326
    %v1659 = vunpack.c.l.b16 %v327
    %v1660 = vunpack.c.h.b16 %v327
    %v1661 = vunpack.c.l.b16 %v328
    %v1662 = vunpack.c.h.b16 %v328
    %v1663 = vunpack.c.l.b16 %v329
    %v1664 = vunpack.c.h.b16 %v329
    %v1665 = vunpack.c.l.b16 %v330
    %v1666 = vunpack.c.h.b16 %v330
    %v1667 = vunpack.c.l.b16 %v331
    %v1668 = vunpack.c.h.b16 %v331
    %v1669 = vunpack.c.l.b16 %v332
    %v1670 = vunpack.c.h.b16 %v332
    %v1671 = vunpack.c.l.b16 %v333
    %v1672 = vunpack.c.h.b16 %v333
    %v1673 = vunpack.c.l.b16 %v334
    %v1674 = vunpack.c.h.b16 %v334
    %v1675 = vunpack.c.l.b16 %v335
    %v1676 = vunpack.c.h.b16 %v335
    %v1677 = vunpack.c.l.b16 %v336
    %v1678 = vunpack.c.h.b16 %v336
    %v1679 = vunpack.c.l.b16 %v337
    %v1680 = vunpack.c.h.b16 %v337
    %v1681 = vunpack.c.l.b16 %v338
    %v1682 = vunpack.c.h.b16 %v338
    %v1683 = vunpack.c.l.b16 %v339
    %v1684 = vunpack.c.h.b16 %v339
    %v1685 = vunpack.c.l.b16 %v340
    %v1686 = vunpack.c.h.b16 %v340
    %v1687 = vunpack.c.l.b16 %v341
    %v1688 = vunpack.c.h.b16 %v341
    %v1689 = vunpack.c.l.b16 %v342
    %v1690 = vunpack.c.h.b16 %v342
    %v1691 = vunpack.c.l.b16 %v343
    %v1692 = vunpack.c.h.b16 %v343
    %v1693 = vunpack.c.l.b16 %v344
    %v1694 = vunpack.c.h.b16 %v344
    %v1695 = vunpack.c.l.b16 %v345
    %v1696 = vunpack.c.h.b16 %v345
    %v1697 = vunpack.c.l.b16 %v346
    %v1698 = vunpack.c.h.b16 %v346
    %v1699 = vunpack.c.l.b16 %v347
    %v1700 = vunpack.c.h.b16 %v347
    %v1701 = vunpack.c.l.b16 %v348
    %v1702 = vunpack.c.h.b16 %v348
    %v1703 = vunpack.c.l.b16 %v349
    %v1704 = vunpack.c.h.b16 %v349
    %v1705 = vunpack.c.l.b16 %v350
    %v1706 = vunpack.c.h.b16 %v350
    %v1707 = vunpack.c.l.b16 %v351
    %v1708 = vunpack.c.h.b16 %v351
    %v1709 = vunpack.c.l.b16 %v352
    %v1710 = vunpack.c.h.b16 %v352
    %v1711 = vunpack.c.l.b16 %v353
    %v1712 = vunpack.c.h.b16 %v353
    %v1713 = vunpack.c.l.b16 %v354
    %v1714 = vunpack.c.h.b16 %v354
    %v1715 = vunpack.c.l.b16 %v355
    %v1716 = vunpack.c.h.b16 %v355
    %v1717 = vunpack.c.l.b16 %v356
    %v1718 = vunpack.c.h.b16 %v356
    %v1719 = vunpack.c.l.b16 %v357
    %v1720 = vunpack.c.h.b16 %v357
    %v1721 = vunpack.c.l.b16 %v358
    %v1722 = vunpack.c.h.b16 %v358
    %v1723 = vunpack.c.l.b16 %v359
    %v1724 = vunpack.c.h.b16 %v359
    %v1725 = vunpack.c.l.b16 %v360
    %v1726 = vunpack.c.h.b16 %v360
    %v1727 = vunpack.c.l.b16 %v361
    %v1728 = vunpack.c.h.b16 %v361
    %v1729 = vunpack.c.l.b16 %v362
    %v1730 = vunpack.c.h.b16 %v362
    %v1731 = vunpack.c.l.b16 %v363
    %v1732 = vunpack.c.h.b16 %v363
    %v1733 = vunpack.c.l.b16 %v364
    %v1734 = vunpack.c.h.b16 %v364
    %v1735 = vunpack.c.l.b16 %v365
    %v1736 = vunpack.c.h.b16 %v365
    %v1737 = vunpack.c.l.b16 %v366
    %v1738 = vunpack.c.h.b16 %v366
    %v1739 = vunpack.c.l.b16 %v367
    %v1740 = vunpack.c.h.b16 %v367
    %v1741 = vunpack.c.l.b16 %v368
    %v1742 = vunpack.c.h.b16 %v368
    %v1743 = vunpack.c.l.b16 %v369
    %v1744 = vunpack.c.h.b16 %v369
    %v1745 = vunpack.c.l.b16 %v370
    %v1746 = vunpack.c.h.b16 %v370
    %v1747 = vunpack.c.l.b16 %v371
    %v1748 = vunpack.c.h.b16 %v371
    %v1749 = vunpack.c.l.b16 %v372
    %v1750 = vunpack.c.h.b16 %v372
    %v1751 = vunpack.c.l.b16 %v373
    %v1752 = vunpack.c.h.b16 %v373
    %v1753 = vunpack.c.l.b16 %v374
    %v1754 = vunpack.c.h.b16 %v374
    %v1755 = vunpack.c.l.b16 %v375
    %v1756 = vunpack.c.h.b16 %v375
    %v1757 = vunpack.c.l.b16 %v376
    %v1758 = vunpack.c.h.b16 %v376
    %v1759 = vunpack.c.l.b16 %v377
    %v1760 = vunpack.c.h.b16 %v377
    %v1761 = vunpack.c.l.b16 %v378
    %v1762 = vunpack.c.h.b16 %v378
    %v1763 = vunpack.c.l.b16 %v379
    %v1764 = vunpack.c.h.b16 %v379
    %v1765 = vunpack.c.l.b16 %v380
    %v1766 = vunpack.c.h.b16 %v380
    %v1767 = vunpack.c.l.b16 %v381
    %v1768 = vunpack.c.h.b16 %v381
    %v1769 = vunpack.c.l.b16 %v382
    %v1770 = vunpack.c.h.b16 %v382
    %v1771 = vunpack.c.l.b16 %v383
    %v1772 = vunpack.c.h.b16 %v383
    %v1773 = vunpack.c.l.b16 %v384
    %v1774 = vunpack.c.h.b16 %v384
    %v1775 = vunpack.c.l.b16 %v385
    %v1776 = vunpack.c.h.b16 %v385
    %v1777 = vunpack.c.l.b16 %v386
    %v1778 = vunpack.c.h.b16 %v386
    %v1779 = vunpack.c.l.b16 %v387
    %v1780 = vunpack.c.h.b16 %v387
    %v1781 = vunpack.c.l.b16 %v388
    %v1782 = vunpack.c.h.b16 %v388
    %v1783 = vunpack.c.l.b16 %v389
    %v1784 = vunpack.c.h.b16 %v389
    %v1785 = vunpack.c.l.b16 %v390
    %v1786 = vunpack.c.h.b16 %v390
    %v1787 = vunpack.c.l.b16 %v391
    %v1788 = vunpack.c.h.b16 %v391
    %v1789 = vunpack.c.l.b16 %v392
    %v1790 = vunpack.c.h.b16 %v392
    %v1791 = vunpack.c.l.b16 %v393
    %v1792 = vunpack.c.h.b16 %v393
    %v1793 = vunpack.c.l.b16 %v394
    %v1794 = vunpack.c.h.b16 %v394
    %v1795 = vunpack.c.l.b16 %v395
    %v1796 = vunpack.c.h.b16 %v395
    %v1797 = vunpack.c.l.b16 %v396
    %v1798 = vunpack.c.h.b16 %v396
    %v1799 = vunpack.c.l.b16 %v397
    %v1800 = vunpack.c.h.b16 %v397
    %v1801 = vunpack.c.l.b16 %v398
    %v1802 = vunpack.c.h.b16 %v398
    %v1803 = vunpack.c.l.b16 %v399
    %v1804 = vunpack.c.h.b16 %v399
    %v1805 = vunpack.c.l.b16 %v400
    %v1806 = vunpack.c.h.b16 %v400
    %v1807 = vunpack.c.l.b16 %v401
    %v1808 = vunpack.c.h.b16 %v401
    %v1809 = vunpack.c.l.b16 %v402
    %v1810 = vunpack.c.h.b16 %v402
    %v1811 = vunpack.c.l.b16 %v403
    %v1812 = vunpack.c.h.b16 %v403
    %v1813 = vunpack.c.l.b16 %v404
    %v1814 = vunpack.c.h.b16 %v404
    %v1815 = vunpack.c.l.b16 %v405
    %v1816 = vunpack.c.h.b16 %v405
    %v1817 = vunpack.c.l.b16 %v406
    %v1818 = vunpack.c.h.b16 %v406
    %v1819 = vunpack.c.l.b16 %v407
    %v1820 = vunpack.c.h.b16 %v407
    %v1821 = vunpack.c.l.b16 %v408
    %v1822 = vunpack.c.h.b16 %v408
    %v1823 = vunpack.c.l.b16 %v409
    %v1824 = vunpack.c.h.b16 %v409
    %v1825 = vunpack.c.l.b16 %v410
    %v1826 = vunpack.c.h.b16 %v410
    %v1827 = vunpack.c.l.b16 %v411
    %v1828 = vunpack.c.h.b16 %v411
    %v1829 = vunpack.c.l.b16 %v412
    %v1830 = vunpack.c.h.b16 %v412
    %v1831 = vunpack.c.l.b16 %v413
    %v1832 = vunpack.c.h.b16 %v413
    %v1833 = vunpack.c.l.b16 %v414
    %v1834 = vunpack.c.h.b16 %v414
    %v1835 = vunpack.c.l.b16 %v415
    %v1836 = vunpack.c.h.b16 %v415
    %v1837 = vunpack.c.l.b16 %v416
    %v1838 = vunpack.c.h.b16 %v416
    %v1839 = vunpack.c.l.b16 %v417
    %v1840 = vunpack.c.h.b16 %v417
    %v1841 = vunpack.c.l.b16 %v418
    %v1842 = vunpack.c.h.b16 %v418
    %v1843 = vunpack.c.l.b16 %v419
    %v1844 = vunpack.c.h.b16 %v419
    %v1845 = vunpack.c.l.b16 %v420
    %v1846 = vunpack.c.h.b16 %v420
    %v1847 = vunpack.c.l.b16 %v421
    %v1848 = vunpack.c.h.b16 %v421
    %v1849 = vunpack.c.l.b16 %v422
    %v1850 = vunpack.c.h.b16 %v422
    %v1851 = vunpack.c.l.b16 %v423
    %v1852 = vunpack.c.h.b16 %v423
    %v1853 = vunpack.c.l.b16 %v424
    %v1854 = vunpack.c.h.b16 %v424
    %v1855 = vunpack.c.l.b16 %v425
    %v1856 = vunpack.c.h.b16 %v425
    %v1857 = vunpack.c.l.b16 %v426
    %v1858 = vunpack.c.h.b16 %v426
    %v1859 = vunpack.c.l.b16 %v427
    %v1860 = vunpack.c.h.b16 %v427
    %v1861 = vunpack.c.l.b16 %v428
    %v1862 = vunpack.c.h.b16 %v428
    %v1863 = vunpack.c.l.b16 %v429
    %v1864 = vunpack.c.h.b16 %v429
    %v1865 = vunpack.c.l.b16 %v430
    %v1866 = vunpack.c.h.b16 %v430
    %v1867 = vunpack.c.l.b16 %v431
    %v1868 = vunpack.c.h.b16 %v431
    %v1869 = vunpack.c.l.b16 %v432
    %v1870 = vunpack.c.h.b16 %v432
    %v1871 = vunpack.c.l.b16 %v433
    %v1872 = vunpack.c.h.b16 %v433
    %v1873 = vunpack.c.l.b16 %v434
    %v1874 = vunpack.c.h.b16 %v434
    %v1875 = vunpack.c.l.b16 %v435
    %v1876 = vunpack.c.h.b16 %v435
    %v1877 = vunpack.c.l.b16 %v436
    %v1878 = vunpack.c.h.b16 %v436
    %v1879 = vunpack.c.l.b16 %v437
    %v1880 = vunpack.c.h.b16 %v437
    %v1881 = vunpack.c.l.b16 %v438
    %v1882 = vunpack.c.h.b16 %v438
    %v1883 = vunpack.c.l.b16 %v439
    %v1884 = vunpack.c.h.b16 %v439
    %v1885 = vunpack.c.l.b16 %v440
    %v1886 = vunpack.c.h.b16 %v440
    %v1887 = vunpack.c.l.b16 %v441
    %v1888 = vunpack.c.h.b16 %v441
    %v1889 = vunpack.c.l.b16 %v442
    %v1890 = vunpack.c.h.b16 %v442
    %v1891 = vunpack.c.l.b16 %v443
    %v1892 = vunpack.c.h.b16 %v443
    %v1893 = vunpack.c.l.b16 %v444
    %v1894 = vunpack.c.h.b16 %v444
    %v1895 = vunpack.c.l.b16 %v445
    %v1896 = vunpack.c.h.b16 %v445
    %v1897 = vunpack.c.l.b16 %v446
    %v1898 = vunpack.c.h.b16 %v446
    %v1899 = vunpack.c.l.b16 %v447
    %v1900 = vunpack.c.h.b16 %v447
    %v1901 = vunpack.c.l.b16 %v448
    %v1902 = vunpack.c.h.b16 %v448
    %v1903 = vunpack.c.l.b16 %v449
    %v1904 = vunpack.c.h.b16 %v449
    %v1905 = vunpack.c.l.b16 %v450
    %v1906 = vunpack.c.h.b16 %v450
    %v1907 = vunpack.c.l.b16 %v451
    %v1908 = vunpack.c.h.b16 %v451
    %v1909 = vunpack.c.l.b16 %v452
    %v1910 = vunpack.c.h.b16 %v452
    %v1911 = vunpack.c.l.b16 %v453
    %v1912 = vunpack.c.h.b16 %v453
    %v1913 = vunpack.c.l.b16 %v454
    %v1914 = vunpack.c.h.b16 %v454
    %v1915 = vunpack.c.l.b16 %v455
    %v1916 = vunpack.c.h.b16 %v455
    %v1917 = vunpack.c.l.b16 %v456
    %v1918 = vunpack.c.h.b16 %v456
    %v1919 = vunpack.c.l.b16 %v457
    %v1920 = vunpack.c.h.b16 %v457
    %v1921 = vunpack.c.l.b16 %v458
    %v1922 = vunpack.c.h.b16 %v458
    %v1923 = vunpack.c.l.b16 %v459
    %v1924 = vunpack.c.h.b16 %v459
    %v1925 = vunpack.c.l.b16 %v460
    %v1926 = vunpack.c.h.b16 %v460
    %v1927 = vunpack.c.l.b16 %v461
    %v1928 = vunpack.c.h.b16 %v461
    %v1929 = vunpack.c.l.b16 %v462
    %v1930 = vunpack.c.h.b16 %v462
    %v1931 = vunpack.c.l.b16 %v463
    %v1932 = vunpack.c.h.b16 %v463
    %v1933 = vunpack.c.l.b16 %v464
    %v1934 = vunpack.c.h.b16 %v464
    %v1935 = vunpack.c.l.b16 %v465
    %v1936 = vunpack.c.h.b16 %v465
    %v1937 = vunpack.c.l.b16 %v466
    %v1938 = vunpack.c.h.b16 %v466
    %v1939 = vunpack.c.l.b16 %v467
    %v1940 = vunpack.c.h.b16 %v467
    %v1941 = vunpack.c.l.b16 %v468
    %v1942 = vunpack.c.h.b16 %v468
    %v1943 = vunpack.c.l.b16 %v469
    %v1944 = vunpack.c.h.b16 %v469
    %v1945 = vunpack.c.l.b16 %v470
    %v1946 = vunpack.c.h.b16 %v470
    %v1947 = vunpack.c.l.b16 %v471
    %v1948 = vunpack.c.h.b16 %v471
    %v1949 = vunpack.c.l.b16 %v472
    %v1950 = vunpack.c.h.b16 %v472
    %v1951 = vunpack.c.l.b16 %v473
    %v1952 = vunpack.c.h.b16 %v473
    %v1953 = vunpack.c.l.b16 %v474
    %v1954 = vunpack.c.h.b16 %v474
    %v1955 = vunpack.c.l.b16 %v475
    %v1956 = vunpack.c.h.b16 %v475
    %v1957 = vunpack.c.l.b16 %v476
    %v1958 = vunpack.c.h.b16 %v476
    %v1959 = vunpack.c.l.b16 %v477
    %v1960 = vunpack.c.h.b16 %v477
    %v1961 = vunpack.c.l.b16 %v478
    %v1962 = vunpack.c.h.b16 %v478
    %v1963 = vunpack.c.l.b16 %v479
    %v1964 = vunpack.c.h.b16 %v479
    %v1965 = vunpack.c.l.b16 %v480
    %v1966 = vunpack.c.h.b16 %v480
    %v1967 = vunpack.c.l.b16 %v481
    %v1968 = vunpack.c.h.b16 %v481
    %v1969 = vunpack.c.l.b16 %v482
    %v1970 = vunpack.c.h.b16 %v482
    %v1971 = vunpack.c.l.b16 %v483
    %v1972 = vunpack.c.h.b16 %v483
    %v1973 = vunpack.c.l.b16 %v484
    %v1974 = vunpack.c.h.b16 %v484
    %v1975 = vunpack.c.l.b16 %v485
    %v1976 = vunpack.c.h.b16 %v485
    %v1977 = vunpack.c.l.b16 %v486
    %v1978 = vunpack.c.h.b16 %v486
    %v1979 = vunpack.c.l.b16 %v487
    %v1980 = vunpack.c.h.b16 %v487
    %v1981 = vunpack.c.l.b16 %v488
    %v1982 = vunpack.c.h.b16 %v488
    %v1983 = vunpack.c.l.b16 %v489
    %v1984 = vunpack.c.h.b16 %v489
    %v1985 = vunpack.c.l.b16 %v490
    %v1986 = vunpack.c.h.b16 %v490
    %v1987 = vunpack.c.l.b16 %v491
    %v1988 = vunpack.c.h.b16 %v491
    %v1989 = vunpack.c.l.b16 %v492
    %v1990 = vunpack.c.h.b16 %v492
    %v1991 = vunpack.c.l.b16 %v493
    %v1992 = vunpack.c.h.b16 %v493
    %v1993 = vunpack.c.l.b16 %v494
    %v1994 = vunpack.c.h.b16 %v494
    %v1995 = vunpack.c.l.b16 %v495
    %v1996 = vunpack.c.h.b16 %v495
    %v1997 = vunpack.c.l.b16 %v496
    %v1998 = vunpack.c.h.b16 %v496
    %v1999 = vunpack.c.l.b16 %v497
    %v2000 = vunpack.c.h.b16 %v497
    %v2001 = vunpack.c.l.b16 %v498
    %v2002 = vunpack.c.h.b16 %v498
    %v2003 = vunpack.c.l.b16 %v499
    %v2004 = vunpack.c.h.b16 %v499
    %v2005 = vunpack.c.l.b16 %v500
    %v2006 = vunpack.c.h.b16 %v500
    %v2007 = vunpack.c.l.b16 %v501
    %v2008 = vunpack.c.h.b16 %v501
    %v2009 = vunpack.c.l.b16 %v502
    %v2010 = vunpack.c.h.b16 %v502
    %v2011 = vunpack.c.l.b16 %v503
    %v2012 = vunpack.c.h.b16 %v503
    %v2013 = vunpack.c.l.b16 %v504
    %v2014 = vunpack.c.h.b16 %v504
    %v2015 = vunpack.c.l.b16 %v505
    %v2016 = vunpack.c.h.b16 %v505
    %v2017 = vunpack.c.l.b16 %v506
    %v2018 = vunpack.c.h.b16 %v506
    %v2019 = vunpack.c.l.b16 %v507
    %v2020 = vunpack.c.h.b16 %v507
    %v2021 = vunpack.c.l.b16 %v508
    %v2022 = vunpack.c.h.b16 %v508
    %v2023 = vunpack.c.l.b16 %v509
    %v2024 = vunpack.c.h.b16 %v509
    %v2025 = vunpack.c.l.b16 %v510
    %v2026 = vunpack.c.h.b16 %v510
    %v2027 = vunpack.c.l.b16 %v511
    %v2028 = vunpack.c.h.b16 %v511
    %v2029 = vunpack.c.l.b16 %v512
    %v2030 = vunpack.c.h.b16 %v512
    %v2031 = vunpack.c.l.b16 %v513
    %v2032 = vunpack.c.h.b16 %v513
    %v2033 = vunpack.c.l.b16 %v514
    %v2034 = vunpack.c.h.b16 %v514
    %v2035 = vunpack.c.l.b16 %v515
    %v2036 = vunpack.c.h.b16 %v515
    %v2037 = vunpack.c.l.b16 %v516
    %v2038 = vunpack.c.h.b16 %v516
    %v2039 = vunpack.c.l.b16 %v517
    %v2040 = vunpack.c.h.b16 %v517
    %v2041 = vunpack.c.l.b16 %v518
    %v2042 = vunpack.c.h.b16 %v518
    %v2043 = vunpack.c.l.b16 %v519
    %v2044 = vunpack.c.h.b16 %v519
    %v2045 = vunpack.c.l.b16 %v520
    %v2046 = vunpack.c.h.b16 %v520
    %v2047 = vunpack.c.l.b16 %v521
    %v2048 = vunpack.c.h.b16 %v521
    %v2049 = vunpack.c.l.b16 %v522
    %v2050 = vunpack.c.h.b16 %v522
    %v2051 = vunpack.c.l.b16 %v523
    %v2052 = vunpack.c.h.b16 %v523
    %v2053 = vunpack.c.l.b16 %v524
    %v2054 = vunpack.c.h.b16 %v524
    %v2055 = vunpack.c.l.b16 %v525
    %v2056 = vunpack.c.h.b16 %v525
    %v2057 = vunpack.c.l.b16 %v526
    %v2058 = vunpack.c.h.b16 %v526
    %v2059 = vunpack.c.l.b16 %v527
    %v2060 = vunpack.c.h.b16 %v527
    %v2061 = vunpack.c.l.b16 %v528
    %v2062 = vunpack.c.h.b16 %v528
    %v2063 = vunpack.c.l.b16 %v529
    %v2064 = vunpack.c.h.b16 %v529
    %v2065 = vunpack.c.l.b16 %v530
    %v2066 = vunpack.c.h.b16 %v530
    %v2067 = vunpack.c.l.b16 %v531
    %v2068 = vunpack.c.h.b16 %v531
    %v2069 = vunpack.c.l.b16 %v532
    %v2070 = vunpack.c.h.b16 %v532
    %v2071 = vunpack.c.l.b16 %v533
    %v2072 = vunpack.c.h.b16 %v533
    %v2073 = vunpack.c.l.b16 %v534
    %v2074 = vunpack.c.h.b16 %v534
    %v2075 = vunpack.c.l.b16 %v535
    %v2076 = vunpack.c.h.b16 %v535
    %v2077 = vunpack.c.l.b16 %v536
    %v2078 = vunpack.c.h.b16 %v536
    %v2079 = vunpack.c.l.b16 %v537
    %v2080 = vunpack.c.h.b16 %v537
    %v2081 = vpack.c.b16 %v1089, %v1057
    %v2082 = vpack.c.b16 %v1090, %v1058
    %v2083 = vpack.c.b16 %v1091, %v1059
    %v2084 = vpack.c.b16 %v1092, %v1060
    %v2085 = vpack.c.b16 %v1093, %v1061
    %v2086 = vpack.c.b16 %v1094, %v1062
    %v2087 = vpack.c.b16 %v1095, %v1063
    %v2088 = vpack.c.b16 %v1096, %v1064
    %v2089 = vpack.c.b16 %v1097, %v1065
    %v2090 = vpack.c.b16 %v1098, %v1066
    %v2091 = vpack.c.b16 %v1099, %v1067
    %v2092 = vpack.c.b16 %v1100, %v1068
    %v2093 = vpack.c.b16 %v1101, %v1069
    %v2094 = vpack.c.b16 %v1102, %v1070
    %v2095 = vpack.c.b16 %v1103, %v1071
    %v2096 = vpack.c.b16 %v1104, %v1072
    %v2097 = vpack.c.b16 %v1105, %v1073
    %v2098 = vpack.c.b16 %v1106, %v1074
    %v2099 = vpack.c.b16 %v1107, %v1075
    %v2100 = vpack.c.b16 %v1108, %v1076
    %v2101 = vpack.c.b16 %v1109, %v1077
    %v2102 = vpack.c.b16 %v1110, %v1078
    %v2103 = vpack.c.b16 %v1111, %v1079
    %v2104 = vpack.c.b16 %v1112, %v1080
    %v2105 = vpack.c.b16 %v1113, %v1081
    %v2106 = vpack.c.b16 %v1114, %v1082
    %v2107 = vpack.c.b16 %v1115, %v1083
    %v2108 = vpack.c.b16 %v1116, %v1084
    %v2109 = vpack.c.b16 %v1117, %v1085
    %v2110 = vpack.c.b16 %v1118, %v1086
    %v2111 = vpack.c.b16 %v1119, %v1087
    %v2112 = vpack.c.b16 %v1120, %v1088
    %v2113 = vpack.c.b16 %v1153, %v1121
    %v2114 = vpack.c.b16 %v1154, %v1122
    %v2115 = vpack.c.b16 %v1155, %v1123
    %v2116 = vpack.c.b16 %v1156, %v1124
    %v2117 = vpack.c.b16 %v1157, %v1125
    %v2118 = vpack.c.b16 %v1158, %v1126
    %v2119 = vpack.c.b16 %v1159, %v1127
    %v2120 = vpack.c.b16 %v1160, %v1128
    %v2121 = vpack.c.b16 %v1161, %v1129
    %v2122 = vpack.c.b16 %v1162, %v1130
    %v2123 = vpack.c.b16 %v1163, %v1131
    %v2124 = vpack.c.b16 %v1164, %v1132
    %v2125 = vpack.c.b16 %v1165, %v1133
    %v2126 = vpack.c.b16 %v1166, %v1134
    %v2127 = vpack.c.b16 %v1167, %v1135
    %v2128 = vpack.c.b16 %v1168, %v1136
    %v2129 = vpack.c.b16 %v1169, %v1137
    %v2130 = vpack.c.b16 %v1170, %v1138
    %v2131 = vpack.c.b16 %v1171, %v1139
    %v2132 = vpack.c.b16 %v1172, %v1140
    %v2133 = vpack.c.b16 %v1173, %v1141
    %v2134 = vpack.c.b16 %v1174, %v1142
    %v2135 = vpack.c.b16 %v1175, %v1143
    %v2136 = vpack.c.b16 %v1176, %v1144
    %v2137 = vpack.c.b16 %v1177, %v1145
    %v2138 = vpack.c.b16 %v1178, %v1146
    %v2139 = vpack.c.b16 %v1179, %v1147
    %v2140 = vpack.c.b16 %v1180, %v1148
    %v2141 = vpack.c.b16 %v1181, %v1149
    %v2142 = vpack.c.b16 %v1182, %v1150
    %v2143 = vpack.c.b16 %v1183, %v1151
    %v2144 = vpack.c.b16 %v1184, %v1152
    %v2145 = vpack.c.b16 %v1217, %v1185
    %v2146 = vpack.c.b16 %v1218, %v1186
    %v2147 = vpack.c.b16 %v1219, %v1187
    %v2148 = vpack.c.b16 %v1220, %v1188
    %v2149 = vpack.c.b16 %v1221, %v1189
    %v2150 = vpack.c.b16 %v1222, %v1190
    %v2151 = vpack.c.b16 %v1223, %v1191
    %v2152 = vpack.c.b16 %v1224, %v1192
    %v2153 = vpack.c.b16 %v1225, %v1193
    %v2154 = vpack.c.b16 %v1226, %v1194
    %v2155 = vpack.c.b16 %v1227, %v1195
    %v2156 = vpack.c.b16 %v1228, %v1196
    %v2157 = vpack.c.b16 %v1229, %v1197
    %v2158 = vpack.c.b16 %v1230, %v1198
    %v2159 = vpack.c.b16 %v1231, %v1199
    %v2160 = vpack.c.b16 %v1232, %v1200
    %v2161 = vpack.c.b16 %v1233, %v1201
    %v2162 = vpack.c.b16 %v1234, %v1202
    %v2163 = vpack.c.b16 %v1235, %v1203
    %v2164 = vpack.c.b16 %v1236, %v1204
    %v2165 = vpack.c.b16 %v1237, %v1205
    %v2166 = vpack.c.b16 %v1238, %v1206
    %v2167 = vpack.c.b16 %v1239, %v1207
    %v2168 = vpack.c.b16 %v1240, %v1208
    %v2169 = vpack.c.b16 %v1241, %v1209
    %v2170 = vpack.c.b16 %v1242, %v1210
    %v2171 = vpack.c.b16 %v1243, %v1211
    %v2172 = vpack.c.b16 %v1244, %v1212
    %v2173 = vpack.c.b16 %v1245, %v1213
    %v2174 = vpack.c.b16 %v1246, %v1214
    %v2175 = vpack.c.b16 %v1247, %v1215
    %v2176 = vpack.c.b16 %v1248, %v1216
    %v2177 = vpack.c.b16 %v1281, %v1249
    %v2178 = vpack.c.b16 %v1282, %v1250
    %v2179 = vpack.c.b16 %v1283, %v1251
    %v2180 = vpack.c.b16 %v1284, %v1252
    %v2181 = vpack.c.b16 %v1285, %v1253
    %v2182 = vpack.c.b16 %v1286, %v1254
    %v2183 = vpack.c.b16 %v1287, %v1255
    %v2184 = vpack.c.b16 %v1288, %v1256
    %v2185 = vpack.c.b16 %v1289, %v1257
    %v2186 = vpack.c.b16 %v1290, %v1258
    %v2187 = vpack.c.b16 %v1291, %v1259
    %v2188 = vpack.c.b16 %v1292, %v1260
    %v2189 = vpack.c.b16 %v1293, %v1261
    %v2190 = vpack.c.b16 %v1294, %v1262
    %v2191 = vpack.c.b16 %v1295, %v1263
    %v2192 = vpack.c.b16 %v1296, %v1264
    %v2193 = vpack.c.b16 %v1297, %v1265
    %v2194 = vpack.c.b16 %v1298, %v1266
    %v2195 = vpack.c.b16 %v1299, %v1267
    %v2196 = vpack.c.b16 %v1300, %v1268
    %v2197 = vpack.c.b16 %v1301, %v1269
    %v2198 = vpack.c.b16 %v1302, %v1270
    %v2199 = vpack.c.b16 %v1303, %v1271
    %v2200 = vpack.c.b16 %v1304, %v1272
    %v2201 = vpack.c.b16 %v1305, %v1273
    %v2202 = vpack.c.b16 %v1306, %v1274
    %v2203 = vpack.c.b16 %v1307, %v1275
    %v2204 = vpack.c.b16 %v1308, %v1276
    %v2205 = vpack.c.b16 %v1309, %v1277
    %v2206 = vpack.c.b16 %v1310, %v1278
    %v2207 = vpack.c.b16 %v1311, %v1279
    %v2208 = vpack.c.b16 %v1312, %v1280
    %v2209 = vpack.c.b16 %v1345, %v1313
    %v2210 = vpack.c.b16 %v1346, %v1314
    %v2211 = vpack.c.b16 %v1347, %v1315
    %v2212 = vpack.c.b16 %v1348, %v1316
    %v2213 = vpack.c.b16 %v1349, %v1317
    %v2214 = vpack.c.b16 %v1350, %v1318
    %v2215 = vpack.c.b16 %v1351, %v1319
    %v2216 = vpack.c.b16 %v1352, %v1320
    %v2217 = vpack.c.b16 %v1353, %v1321
    %v2218 = vpack.c.b16 %v1354, %v1322
    %v2219 = vpack.c.b16 %v1355, %v1323
    %v2220 = vpack.c.b16 %v1356, %v1324
    %v2221 = vpack.c.b16 %v1357, %v1325
    %v2222 = vpack.c.b16 %v1358, %v1326
    %v2223 = vpack.c.b16 %v1359, %v1327
    %v2224 = vpack.c.b16 %v1360, %v1328
    %v2225 = vpack.c.b16 %v1361, %v1329
    %v2226 = vpack.c.b16 %v1362, %v1330
    %v2227 = vpack.c.b16 %v1363, %v1331
    %v2228 = vpack.c.b16 %v1364, %v1332
    %v2229 = vpack.c.b16 %v1365, %v1333
    %v2230 = vpack.c.b16 %v1366, %v1334
    %v2231 = vpack.c.b16 %v1367, %v1335
    %v2232 = vpack.c.b16 %v1368, %v1336
    %v2233 = vpack.c.b16 %v1369, %v1337
    %v2234 = vpack.c.b16 %v1370, %v1338
    %v2235 = vpack.c.b16 %v1371, %v1339
    %v2236 = vpack.c.b16 %v1372, %v1340
    %v2237 = vpack.c.b16 %v1373, %v1341
    %v2238 = vpack.c.b16 %v1374, %v1342
    %v2239 = vpack.c.b16 %v1375, %v1343
    %v2240 = vpack.c.b16 %v1376, %v1344
    %v2241 = vpack.c.b16 %v1409, %v1377
    %v2242 = vpack.c.b16 %v1410, %v1378
    %v2243 = vpack.c.b16 %v1411, %v1379
    %v2244 = vpack.c.b16 %v1412, %v1380
    %v2245 = vpack.c.b16 %v1413, %v1381
    %v2246 = vpack.c.b16 %v1414, %v1382
    %v2247 = vpack.c.b16 %v1415, %v1383
    %v2248 = vpack.c.b16 %v1416, %v1384
    %v2249 = vpack.c.b16 %v1417, %v1385
    %v2250 = vpack.c.b16 %v1418, %v1386
    %v2251 = vpack.c.b16 %v1419, %v1387
    %v2252 = vpack.c.b16 %v1420, %v1388
    %v2253 = vpack.c.b16 %v1421, %v1389
    %v2254 = vpack.c.b16 %v1422, %v1390
    %v2255 = vpack.c.b16 %v1423, %v1391
    %v2256 = vpack.c.b16 %v1424, %v1392
    %v2257 = vpack.c.b16 %v1425, %v1393
    %v2258 = vpack.c.b16 %v1426, %v1394
    %v2259 = vpack.c.b16 %v1427, %v1395
    %v2260 = vpack.c.b16 %v1428, %v1396
    %v2261 = vpack.c.b16 %v1429, %v1397
    %v2262 = vpack.c.b16 %v1430, %v1398
    %v2263 = vpack.c.b16 %v1431, %v1399
    %v2264 = vpack.c.b16 %v1432, %v1400
    %v2265 = vpack.c.b16 %v1433, %v1401
    %v2266 = vpack.c.b16 %v1434, %v1402
    %v2267 = vpack.c.b16 %v1435, %v1403
    %v2268 = vpack.c.b16 %v1436, %v1404
    %v2269 = vpack.c.b16 %v1437, %v1405
    %v2270 = vpack.c.b16 %v1438, %v1406
    %v2271 = vpack.c.b16 %v1439, %v1407
    %v2272 = vpack.c.b16 %v1440, %v1408
    %v2273 = vpack.c.b16 %v1473, %v1441
    %v2274 = vpack.c.b16 %v1474, %v1442
    %v2275 = vpack.c.b16 %v1475, %v1443
    %v2276 = vpack.c.b16 %v1476, %v1444
    %v2277 = vpack.c.b16 %v1477, %v1445
    %v2278 = vpack.c.b16 %v1478, %v1446
    %v2279 = vpack.c.b16 %v1479, %v1447
    %v2280 = vpack.c.b16 %v1480, %v1448
    %v2281 = vpack.c.b16 %v1481, %v1449
    %v2282 = vpack.c.b16 %v1482, %v1450
    %v2283 = vpack.c.b16 %v1483, %v1451
    %v2284 = vpack.c.b16 %v1484, %v1452
    %v2285 = vpack.c.b16 %v1485, %v1453
    %v2286 = vpack.c.b16 %v1486, %v1454
    %v2287 = vpack.c.b16 %v1487, %v1455
    %v2288 = vpack.c.b16 %v1488, %v1456
    %v2289 = vpack.c.b16 %v1489, %v1457
    %v2290 = vpack.c.b16 %v1490, %v1458
    %v2291 = vpack.c.b16 %v1491, %v1459
    %v2292 = vpack.c.b16 %v1492, %v1460
    %v2293 = vpack.c.b16 %v1493, %v1461
    %v2294 = vpack.c.b16 %v1494, %v1462
    %v2295 = vpack.c.b16 %v1495, %v1463
    %v2296 = vpack.c.b16 %v1496, %v1464
    %v2297 = vpack.c.b16 %v1497, %v1465
    %v2298 = vpack.c.b16 %v1498, %v1466
    %v2299 = vpack.c.b16 %v1499, %v1467
    %v2300 = vpack.c.b16 %v1500, %v1468
    %v2301 = vpack.c.b16 %v1501, %v1469
    %v2302 = vpack.c.b16 %v1502, %v1470
    %v2303 = vpack.c.b16 %v1503, %v1471
    %v2304 = vpack.c.b16 %v1504, %v1472
    %v2305 = vpack.c.b16 %v1537, %v1505
    %v2306 = vpack.c.b16 %v1538, %v1506
    %v2307 = vpack.c.b16 %v1539, %v1507
    %v2308 = vpack.c.b16 %v1540, %v1508
    %v2309 = vpack.c.b16 %v1541, %v1509
    %v2310 = vpack.c.b16 %v1542, %v1510
    %v2311 = vpack.c.b16 %v1543, %v1511
    %v2312 = vpack.c.b16 %v1544, %v1512
    %v2313 = vpack.c.b16 %v1545, %v1513
    %v2314 = vpack.c.b16 %v1546, %v1514
    %v2315 = vpack.c.b16 %v1547, %v1515
    %v2316 = vpack.c.b16 %v1548, %v1516
    %v2317 = vpack.c.b16 %v1549, %v1517
    %v2318 = vpack.c.b16 %v1550, %v1518
    %v2319 = vpack.c.b16 %v1551, %v1519
    %v2320 = vpack.c.b16 %v1552, %v1520
    %v2321 = vpack.c.b16 %v1553, %v1521
    %v2322 = vpack.c.b16 %v1554, %v1522
    %v2323 = vpack.c.b16 %v1555, %v1523
    %v2324 = vpack.c.b16 %v1556, %v1524
    %v2325 = vpack.c.b16 %v1557, %v1525
    %v2326 = vpack.c.b16 %v1558, %v1526
    %v2327 = vpack.c.b16 %v1559, %v1527
    %v2328 = vpack.c.b16 %v1560, %v1528
    %v2329 = vpack.c.b16 %v1561, %v1529
    %v2330 = vpack.c.b16 %v1562, %v1530
    %v2331 = vpack.c.b16 %v1563, %v1531
    %v2332 = vpack.c.b16 %v1564, %v1532
    %v2333 = vpack.c.b16 %v1565, %v1533
    %v2334 = vpack.c.b16 %v1566, %v1534
    %v2335 = vpack.c.b16 %v1567, %v1535
    %v2336 = vpack.c.b16 %v1568, %v1536
    %v2337 = vpack.c.b16 %v1601, %v1569
    %v2338 = vpack.c.b16 %v1602, %v1570
    %v2339 = vpack.c.b16 %v1603, %v1571
    %v2340 = vpack.c.b16 %v1604, %v1572
    %v2341 = vpack.c.b16 %v1605, %v1573
    %v2342 = vpack.c.b16 %v1606, %v1574
    %v2343 = vpack.c.b16 %v1607, %v1575
    %v2344 = vpack.c.b16 %v1608, %v1576
    %v2345 = vpack.c.b16 %v1609, %v1577
    %v2346 = vpack.c.b16 %v1610, %v1578
    %v2347 = vpack.c.b16 %v1611, %v1579
    %v2348 = vpack.c.b16 %v1612, %v1580
    %v2349 = vpack.c.b16 %v1613, %v1581
    %v2350 = vpack.c.b16 %v1614, %v1582
    %v2351 = vpack.c.b16 %v1615, %v1583
    %v2352 = vpack.c.b16 %v1616, %v1584
    %v2353 = vpack.c.b16 %v1617, %v1585
    %v2354 = vpack.c.b16 %v1618, %v1586
    %v2355 = vpack.c.b16 %v1619, %v1587
    %v2356 = vpack.c.b16 %v1620, %v1588
    %v2357 = vpack.c.b16 %v1621, %v1589
    %v2358 = vpack.c.b16 %v1622, %v1590
    %v2359 = vpack.c.b16 %v1623, %v1591
    %v2360 = vpack.c.b16 %v1624, %v1592
    %v2361 = vpack.c.b16 %v1625, %v1593
    %v2362 = vpack.c.b16 %v1626, %v1594
    %v2363 = vpack.c.b16 %v1627, %v1595
    %v2364 = vpack.c.b16 %v1628, %v1596
    %v2365 = vpack.c.b16 %v1629, %v1597
    %v2366 = vpack.c.b16 %v1630, %v1598
    %v2367 = vpack.c.b16 %v1631, %v1599
    %v2368 = vpack.c.b16 %v1632, %v1600
    %v2369 = vpack.c.b16 %v1665, %v1633
    %v2370 = vpack.c.b16 %v1666, %v1634
    %v2371 = vpack.c.b16 %v1667, %v1635
    %v2372 = vpack.c.b16 %v1668, %v1636
    %v2373 = vpack.c.b16 %v1669, %v1637
    %v2374 = vpack.c.b16 %v1670, %v1638
    %v2375 = vpack.c.b16 %v1671, %v1639
    %v2376 = vpack.c.b16 %v1672, %v1640
    %v2377 = vpack.c.b16 %v1673, %v1641
    %v2378 = vpack.c.b16 %v1674, %v1642
    %v2379 = vpack.c.b16 %v1675, %v1643
    %v2380 = vpack.c.b16 %v1676, %v1644
    %v2381 = vpack.c.b16 %v1677, %v1645
    %v2382 = vpack.c.b16 %v1678, %v1646
    %v2383 = vpack.c.b16 %v1679, %v1647
    %v2384 = vpack.c.b16 %v1680, %v1648
    %v2385 = vpack.c.b16 %v1681, %v1649
    %v2386 = vpack.c.b16 %v1682, %v1650
    %v2387 = vpack.c.b16 %v1683, %v1651
    %v2388 = vpack.c.b16 %v1684, %v1652
    %v2389 = vpack.c.b16 %v1685, %v1653
    %v2390 = vpack.c.b16 %v1686, %v1654
    %v2391 = vpack.c.b16 %v1687, %v1655
    %v2392 = vpack.c.b16 %v1688, %v1656
    %v2393 = vpack.c.b16 %v1689, %v1657
    %v2394 = vpack.c.b16 %v1690, %v1658
    %v2395 = vpack.c.b16 %v1691, %v1659
    %v2396 = vpack.c.b16 %v1692, %v1660
    %v2397 = vpack.c.b16 %v1693, %v1661
    %v2398 = vpack.c.b16 %v1694, %v1662
    %v2399 = vpack.c.b16 %v1695, %v1663
    %v2400 = vpack.c.b16 %v1696, %v1664
    %v2401 = vpack.c.b16 %v1729, %v1697
    %v2402 = vpack.c.b16 %v1730, %v1698
    %v2403 = vpack.c.b16 %v1731, %v1699
    %v2404 = vpack.c.b16 %v1732, %v1700
    %v2405 = vpack.c.b16 %v1733, %v1701
    %v2406 = vpack.c.b16 %v1734, %v1702
    %v2407 = vpack.c.b16 %v1735, %v1703
    %v2408 = vpack.c.b16 %v1736, %v1704
    %v2409 = vpack.c.b16 %v1737, %v1705
    %v2410 = vpack.c.b16 %v1738, %v1706
    %v2411 = vpack.c.b16 %v1739, %v1707
    %v2412 = vpack.c.b16 %v1740, %v1708
    %v2413 = vpack.c.b16 %v1741, %v1709
    %v2414 = vpack.c.b16 %v1742, %v1710
    %v2415 = vpack.c.b16 %v1743, %v1711
    %v2416 = vpack.c.b16 %v1744, %v1712
    %v2417 = vpack.c.b16 %v1745, %v1713
    %v2418 = vpack.c.b16 %v1746, %v1714
    %v2419 = vpack.c.b16 %v1747, %v1715
    %v2420 = vpack.c.b16 %v1748, %v1716
    %v2421 = vpack.c.b16 %v1749, %v1717
    %v2422 = vpack.c.b16 %v1750, %v1718
    %v2423 = vpack.c.b16 %v1751, %v1719
    %v2424 = vpack.c.b16 %v1752, %v1720
    %v2425 = vpack.c.b16 %v1753, %v1721
    %v2426 = vpack.c.b16 %v1754, %v1722
    %v2427 = vpack.c.b16 %v1755, %v1723
    %v2428 = vpack.c.b16 %v1756, %v1724
    %v2429 = vpack.c.b16 %v1757, %v1725
    %v2430 = vpack.c.b16 %v1758, %v1726
    %v2431 = vpack.c.b16 %v1759, %v1727
    %v2432 = vpack.c.b16 %v1760, %v1728
    %v2433 = vpack.c.b16 %v1793, %v1761
    %v2434 = vpack.c.b16 %v1794, %v1762
    %v2435 = vpack.c.b16 %v1795, %v1763
    %v2436 = vpack.c.b16 %v1796, %v1764
    %v2437 = vpack.c.b16 %v1797, %v1765
    %v2438 = vpack.c.b16 %v1798, %v1766
    %v2439 = vpack.c.b16 %v1799, %v1767
    %v2440 = vpack.c.b16 %v1800, %v1768
    %v2441 = vpack.c.b16 %v1801, %v1769
    %v2442 = vpack.c.b16 %v1802, %v1770
    %v2443 = vpack.c.b16 %v1803, %v1771
    %v2444 = vpack.c.b16 %v1804, %v1772
    %v2445 = vpack.c.b16 %v1805, %v1773
    %v2446 = vpack.c.b16 %v1806, %v1774
    %v2447 = vpack.c.b16 %v1807, %v1775
    %v2448 = vpack.c.b16 %v1808, %v1776
    %v2449 = vpack.c.b16 %v1809, %v1777
    %v2450 = vpack.c.b16 %v1810, %v1778
    %v2451 = vpack.c.b16 %v1811, %v1779
    %v2452 = vpack.c.b16 %v1812, %v1780
    %v2453 = vpack.c.b16 %v1813, %v1781
    %v2454 = vpack.c.b16 %v1814, %v1782
    %v2455 = vpack.c.b16 %v1815, %v1783
    %v2456 = vpack.c.b16 %v1816, %v1784
    %v2457 = vpack.c.b16 %v1817, %v1785
    %v2458 = vpack.c.b16 %v1818, %v1786
    %v2459 = vpack.c.b16 %v1819, %v1787
    %v2460 = vpack.c.b16 %v1820, %v1788
    %v2461 = vpack.c.b16 %v1821, %v1789
    %v2462 = vpack.c.b16 %v1822, %v1790
    %v2463 = vpack.c.b16 %v1823, %v1791
    %v2464 = vpack.c.b16 %v1824, %v1792
    %v2465 = vpack.c.b16 %v1857, %v1825
    %v2466 = vpack.c.b16 %v1858, %v1826
    %v2467 = vpack.c.b16 %v1859, %v1827
    %v2468 = vpack.c.b16 %v1860, %v1828
    %v2469 = vpack.c.b16 %v1861, %v1829
    %v2470 = vpack.c.b16 %v1862, %v1830
    %v2471 = vpack.c.b16 %v1863, %v1831
    %v2472 = vpack.c.b16 %v1864, %v1832
    %v2473 = vpack.c.b16 %v1865, %v1833
    %v2474 = vpack.c.b16 %v1866, %v1834
    %v2475 = vpack.c.b16 %v1867, %v1835
    %v2476 = vpack.c.b16 %v1868, %v1836
    %v2477 = vpack.c.b16 %v1869, %v1837
    %v2478 = vpack.c.b16 %v1870, %v1838
    %v2479 = vpack.c.b16 %v1871, %v1839
    %v2480 = vpack.c.b16 %v1872, %v1840
    %v2481 = vpack.c.b16 %v1873, %v1841
    %v2482 = vpack.c.b16 %v1874, %v1842
    %v2483 = vpack.c.b16 %v1875, %v1843
    %v2484 = vpack.c.b16 %v1876, %v1844
    %v2485 = vpack.c.b16 %v1877, %v1845
    %v2486 = vpack.c.b16 %v1878, %v1846
    %v2487 = vpack.c.b16 %v1879, %v1847
    %v2488 = vpack.c.b16 %v1880, %v1848
    %v2489 = vpack.c.b16 %v1881, %v1849
    %v2490 = vpack.c.b16 %v1882, %v1850
    %v2491 = vpack.c.b16 %v1883, %v1851
    %v2492 = vpack.c.b16 %v1884, %v1852
    %v2493 = vpack.c.b16 %v1885, %v1853
    %v2494 = vpack.c.b16 %v1886, %v1854
    %v2495 = vpack.c.b16 %v1887, %v1855
    %v2496 = vpack.c.b16 %v1888, %v1856
    %v2497 = vpack.c.b16 %v1921, %v1889
    %v2498 = vpack.c.b16 %v1922, %v1890
    %v2499 = vpack.c.b16 %v1923, %v1891
    %v2500 = vpack.c.b16 %v1924, %v1892
    %v2501 = vpack.c.b16 %v1925, %v1893
    %v2502 = vpack.c.b16 %v1926, %v1894
    %v2503 = vpack.c.b16 %v1927, %v1895
    %v2504 = vpack.c.b16 %v1928, %v1896
    %v2505 = vpack.c.b16 %v1929, %v1897
    %v2506 = vpack.c.b16 %v1930, %v1898
    %v2507 = vpack.c.b16 %v1931, %v1899
    %v2508 = vpack.c.b16 %v1932, %v1900
    %v2509 = vpack.c.b16 %v1933, %v1901
    %v2510 = vpack.c.b16 %v1934, %v1902
    %v2511 = vpack.c.b16 %v1935, %v1903
    %v2512 = vpack.c.b16 %v1936, %v1904
    %v2513 = vpack.c.b16 %v1937, %v1905
    %v2514 = vpack.c.b16 %v1938, %v1906
    %v2515 = vpack.c.b16 %v1939, %v1907
    %v2516 = vpack.c.b16 %v1940, %v1908
    %v2517 = vpack.c.b16 %v1941, %v1909
    %v2518 = vpack.c.b16 %v1942, %v1910
    %v2519 = vpack.c.b16 %v1943, %v1911
    %v2520 = vpack.c.b16 %v1944, %v1912
    %v2521 = vpack.c.b16 %v1945, %v1913
    %v2522 = vpack.c.b16 %v1946, %v1914
    %v2523 = vpack.c.b16 %v1947, %v1915
    %v2524 = vpack.c.b16 %v1948, %v1916
    %v2525 = vpack.c.b16 %v1949, %v1917
    %v2526 = vpack.c.b16 %v1950, %v1918
    %v2527 = vpack.c.b16 %v1951, %v1919
    %v2528 = vpack.c.b16 %v1952, %v1920
    %v2529 = vpack.c.b16 %v1985, %v1953
    %v2530 = vpack.c.b16 %v1986, %v1954
    %v2531 = vpack.c.b16 %v1987, %v1955
    %v2532 = vpack.c.b16 %v1988, %v1956
    %v2533 = vpack.c.b16 %v1989, %v1957
    %v2534 = vpack.c.b16 %v1990, %v1958
    %v2535 = vpack.c.b16 %v1991, %v1959
    %v2536 = vpack.c.b16 %v1992, %v1960
    %v2537 = vpack.c.b16 %v1993, %v1961
    %v2538 = vpack.c.b16 %v1994, %v1962
    %v2539 = vpack.c.b16 %v1995, %v1963
    %v2540 = vpack.c.b16 %v1996, %v1964
    %v2541 = vpack.c.b16 %v1997, %v1965
    %v2542 = vpack.c.b16 %v1998, %v1966
    %v2543 = vpack.c.b16 %v1999, %v1967
    %v2544 = vpack.c.b16 %v2000, %v1968
    %v2545 = vpack.c.b16 %v2001, %v1969
    %v2546 = vpack.c.b16 %v2002, %v1970
    %v2547 = vpack.c.b16 %v2003, %v1971
    %v2548 = vpack.c.b16 %v2004, %v1972
    %v2549 = vpack.c.b16 %v2005, %v1973
    %v2550 = vpack.c.b16 %v2006, %v1974
    %v2551 = vpack.c.b16 %v2007, %v1975
    %v2552 = vpack.c.b16 %v2008, %v1976
    %v2553 = vpack.c.b16 %v2009, %v1977
    %v2554 = vpack.c.b16 %v2010, %v1978
    %v2555 = vpack.c.b16 %v2011, %v1979
    %v2556 = vpack.c.b16 %v2012, %v1980
    %v2557 = vpack.c.b16 %v2013, %v1981
    %v2558 = vpack.c.b16 %v2014, %v1982
    %v2559 = vpack.c.b16 %v2015, %v1983
    %v2560 = vpack.c.b16 %v2016, %v1984
    %v2561 = vpack.c.b16 %v2049, %v2017
    %v2562 = vpack.c.b16 %v2050, %v2018
    %v2563 = vpack.c.b16 %v2051, %v2019
    %v2564 = vpack.c.b16 %v2052, %v2020
    %v2565 = vpack.c.b16 %v2053, %v2021
    %v2566 = vpack.c.b16 %v2054, %v2022
    %v2567 = vpack.c.b16 %v2055, %v2023
    %v2568 = vpack.c.b16 %v2056, %v2024
    %v2569 = vpack.c.b16 %v2057, %v2025
    %v2570 = vpack.c.b16 %v2058, %v2026
    %v2571 = vpack.c.b16 %v2059, %v2027
    %v2572 = vpack.c.b16 %v2060, %v2028
    %v2573 = vpack.c.b16 %v2061, %v2029
    %v2574 = vpack.c.b16 %v2062, %v2030
    %v2575 = vpack.c.b16 %v2063, %v2031
    %v2576 = vpack.c.b16 %v2064, %v2032
    %v2577 = vpack.c.b16 %v2065, %v2033
    %v2578 = vpack.c.b16 %v2066, %v2034
    %v2579 = vpack.c.b16 %v2067, %v2035
    %v2580 = vpack.c.b16 %v2068, %v2036
    %v2581 = vpack.c.b16 %v2069, %v2037
    %v2582 = vpack.c.b16 %v2070, %v2038
    %v2583 = vpack.c.b16 %v2071, %v2039
    %v2584 = vpack.c.b16 %v2072, %v2040
    %v2585 = vpack.c.b16 %v2073, %v2041
    %v2586 = vpack.c.b16 %v2074, %v2042
    %v2587 = vpack.c.b16 %v2075, %v2043
    %v2588 = vpack.c.b16 %v2076, %v2044
    %v2589 = vpack.c.b16 %v2077, %v2045
    %v2590 = vpack.c.b16 %v2078, %v2046
    %v2591 = vpack.c.b16 %v2079, %v2047
    %v2592 = vpack.c.b16 %v2080, %v2048
    %3105 = vmatprep.subr.bf16.mxu0 %v2306
    %3106 = vmatpush1.bf16.msra.mxu0 %v2305
    %3107 = vmatprep.subr.bf16.mxu0 %v2274
    %3108 = vmatpush1.bf16.msra.mxu0 %v2273
    %3109 = vmatprep.subr.bf16.mxu0 %v2242
    %3110 = vmatpush1.bf16.msra.mxu0 %v2241
    %3111 = vmatprep.subr.bf16.mxu0 %v2210
    %3112 = vmatpush1.bf16.msra.mxu0 %v2209
    %3113 = vmatprep.subr.bf16.mxu0 %v2178
    %3114 = vmatpush1.bf16.msra.mxu0 %v2177
    %3115 = vmatprep.subr.bf16.mxu0 %v2146
    %3116 = vmatpush1.bf16.msra.mxu0 %v2145
    %3117 = vmatprep.subr.bf16.mxu0 %v2114
    %3118 = vmatpush1.bf16.msra.mxu0 %v2113
    %3119 = vmatprep.subr.bf16.mxu0 %v2082
    %3120 = vmatpush1.bf16.msra.mxu0 %v2081
    %3121 = vmatprep.subr.bf16.mxu0 %v2562
    %3122 = vmatpush2.bf16.msra.mxu0 %v2561
    %3123 = vmatprep.subr.bf16.mxu0 %v2530
    %3124 = vmatpush2.bf16.msra.mxu0 %v2529
    %3125 = vmatprep.subr.bf16.mxu0 %v2498
    %3126 = vmatpush2.bf16.msra.mxu0 %v2497
    %3127 = vmatprep.subr.bf16.mxu0 %v2466
    %3128 = vmatpush2.bf16.msra.mxu0 %v2465
    %3129 = vmatprep.subr.bf16.mxu0 %v2434
    %3130 = vmatpush2.bf16.msra.mxu0 %v2433
    %3131 = vmatprep.subr.bf16.mxu0 %v2402
    %3132 = vmatpush2.bf16.msra.mxu0 %v2401
    %3133 = vmatprep.subr.bf16.mxu0 %v2370
    %3134 = vmatpush2.bf16.msra.mxu0 %v2369
    %3135 = vmatprep.subr.bf16.mxu0 %v2338
    %3136 = vmatpush2.bf16.msra.mxu0 %v2337
    %3137 = vmatprep.mubr.bf16.mxu0 %v542
    %3138 = vmatmul.mubr.bf16.gmra.mxu0 %v541
    %v3139 = vpop.f32.mrf.mxu0
    %v3140 = vadd.f32 0.0, %v3139
    %v3141 = vpop.f32.mrf.mxu0
    %v3142 = vadd.f32 0.0, %v3141
    %v3143 = vpop.f32.mrf.mxu0
    %v3144 = vpop.f32.mrf.mxu0
    %3145 = vdwg.mxu0
    %3146 = vmatprep.subr.bf16.mxu0 %v2308
    %3147 = vmatpush1.bf16.msra.mxu0 %v2307
    %3148 = vmatprep.subr.bf16.mxu0 %v2276
    %3149 = vmatpush1.bf16.msra.mxu0 %v2275
    %3150 = vmatprep.subr.bf16.mxu0 %v2244
    %3151 = vmatpush1.bf16.msra.mxu0 %v2243
    %3152 = vmatprep.subr.bf16.mxu0 %v2212
    %3153 = vmatpush1.bf16.msra.mxu0 %v2211
    %3154 = vmatprep.subr.bf16.mxu0 %v2180
    %3155 = vmatpush1.bf16.msra.mxu0 %v2179
    %3156 = vmatprep.subr.bf16.mxu0 %v2148
    %3157 = vmatpush1.bf16.msra.mxu0 %v2147
    %3158 = vmatprep.subr.bf16.mxu0 %v2116
    %3159 = vmatpush1.bf16.msra.mxu0 %v2115
    %3160 = vmatprep.subr.bf16.mxu0 %v2084
    %3161 = vmatpush1.bf16.msra.mxu0 %v2083
    %3162 = vmatprep.subr.bf16.mxu0 %v2564
    %3163 = vmatpush2.bf16.msra.mxu0 %v2563
    %3164 = vmatprep.subr.bf16.mxu0 %v2532
    %3165 = vmatpush2.bf16.msra.mxu0 %v2531
    %3166 = vmatprep.subr.bf16.mxu0 %v2500
    %3167 = vmatpush2.bf16.msra.mxu0 %v2499
    %3168 = vmatprep.subr.bf16.mxu0 %v2468
    %3169 = vmatpush2.bf16.msra.mxu0 %v2467
    %3170 = vmatprep.subr.bf16.mxu0 %v2436
    %3171 = vmatpush2.bf16.msra.mxu0 %v2435
    %3172 = vmatprep.subr.bf16.mxu0 %v2404
    %3173 = vmatpush2.bf16.msra.mxu0 %v2403
    %3174 = vmatprep.subr.bf16.mxu0 %v2372
    %3175 = vmatpush2.bf16.msra.mxu0 %v2371
    %3176 = vmatprep.subr.bf16.mxu0 %v2340
    %3177 = vmatpush2.bf16.msra.mxu0 %v2339
    %3178 = vmatprep.mubr.bf16.mxu0 %v542
    %3179 = vmatmul.mubr.bf16.gmra.mxu0 %v541
    %v3180 = vpop.f32.mrf.mxu0
    %v3181 = vadd.f32 0.0, %v3180
    %v3182 = vpop.f32.mrf.mxu0
    %v3183 = vadd.f32 0.0, %v3182
    %v3184 = vpop.f32.mrf.mxu0
    %v3185 = vpop.f32.mrf.mxu0
    %3186 = vdwg.mxu0
    %3187 = vmatprep.subr.bf16.mxu0 %v2310
    %3188 = vmatpush1.bf16.msra.mxu0 %v2309
    %3189 = vmatprep.subr.bf16.mxu0 %v2278
    %3190 = vmatpush1.bf16.msra.mxu0 %v2277
    %3191 = vmatprep.subr.bf16.mxu0 %v2246
    %3192 = vmatpush1.bf16.msra.mxu0 %v2245
    %3193 = vmatprep.subr.bf16.mxu0 %v2214
    %3194 = vmatpush1.bf16.msra.mxu0 %v2213
    %3195 = vmatprep.subr.bf16.mxu0 %v2182
    %3196 = vmatpush1.bf16.msra.mxu0 %v2181
    %3197 = vmatprep.subr.bf16.mxu0 %v2150
    %3198 = vmatpush1.bf16.msra.mxu0 %v2149
    %3199 = vmatprep.subr.bf16.mxu0 %v2118
    %3200 = vmatpush1.bf16.msra.mxu0 %v2117
    %3201 = vmatprep.subr.bf16.mxu0 %v2086
    %3202 = vmatpush1.bf16.msra.mxu0 %v2085
    %3203 = vmatprep.subr.bf16.mxu0 %v2566
    %3204 = vmatpush2.bf16.msra.mxu0 %v2565
    %3205 = vmatprep.subr.bf16.mxu0 %v2534
    %3206 = vmatpush2.bf16.msra.mxu0 %v2533
    %3207 = vmatprep.subr.bf16.mxu0 %v2502
    %3208 = vmatpush2.bf16.msra.mxu0 %v2501
    %3209 = vmatprep.subr.bf16.mxu0 %v2470
    %3210 = vmatpush2.bf16.msra.mxu0 %v2469
    %3211 = vmatprep.subr.bf16.mxu0 %v2438
    %3212 = vmatpush2.bf16.msra.mxu0 %v2437
    %3213 = vmatprep.subr.bf16.mxu0 %v2406
    %3214 = vmatpush2.bf16.msra.mxu0 %v2405
    %3215 = vmatprep.subr.bf16.mxu0 %v2374
    %3216 = vmatpush2.bf16.msra.mxu0 %v2373
    %3217 = vmatprep.subr.bf16.mxu0 %v2342
    %3218 = vmatpush2.bf16.msra.mxu0 %v2341
    %3219 = vmatprep.mubr.bf16.mxu0 %v542
    %3220 = vmatmul.mubr.bf16.gmra.mxu0 %v541
    %v3221 = vpop.f32.mrf.mxu0
    %v3222 = vadd.f32 0.0, %v3221
    %v3223 = vpop.f32.mrf.mxu0
    %v3224 = vadd.f32 0.0, %v3223
    %v3225 = vpop.f32.mrf.mxu0
    %v3226 = vpop.f32.mrf.mxu0
    %3227 = vdwg.mxu0
    %3228 = vmatprep.subr.bf16.mxu0 %v2312
    %3229 = vmatpush1.bf16.msra.mxu0 %v2311
    %3230 = vmatprep.subr.bf16.mxu0 %v2280
    %3231 = vmatpush1.bf16.msra.mxu0 %v2279
    %3232 = vmatprep.subr.bf16.mxu0 %v2248
    %3233 = vmatpush1.bf16.msra.mxu0 %v2247
    %3234 = vmatprep.subr.bf16.mxu0 %v2216
    %3235 = vmatpush1.bf16.msra.mxu0 %v2215
    %3236 = vmatprep.subr.bf16.mxu0 %v2184
    %3237 = vmatpush1.bf16.msra.mxu0 %v2183
    %3238 = vmatprep.subr.bf16.mxu0 %v2152
    %3239 = vmatpush1.bf16.msra.mxu0 %v2151
    %3240 = vmatprep.subr.bf16.mxu0 %v2120
    %3241 = vmatpush1.bf16.msra.mxu0 %v2119
    %3242 = vmatprep.subr.bf16.mxu0 %v2088
    %3243 = vmatpush1.bf16.msra.mxu0 %v2087
    %3244 = vmatprep.subr.bf16.mxu0 %v2568
    %3245 = vmatpush2.bf16.msra.mxu0 %v2567
    %3246 = vmatprep.subr.bf16.mxu0 %v2536
    %3247 = vmatpush2.bf16.msra.mxu0 %v2535
    %3248 = vmatprep.subr.bf16.mxu0 %v2504
    %3249 = vmatpush2.bf16.msra.mxu0 %v2503
    %3250 = vmatprep.subr.bf16.mxu0 %v2472
    %3251 = vmatpush2.bf16.msra.mxu0 %v2471
    %3252 = vmatprep.subr.bf16.mxu0 %v2440
    %3253 = vmatpush2.bf16.msra.mxu0 %v2439
    %3254 = vmatprep.subr.bf16.mxu0 %v2408
    %3255 = vmatpush2.bf16.msra.mxu0 %v2407
    %3256 = vmatprep.subr.bf16.mxu0 %v2376
    %3257 = vmatpush2.bf16.msra.mxu0 %v2375
    %3258 = vmatprep.subr.bf16.mxu0 %v2344
    %3259 = vmatpush2.bf16.msra.mxu0 %v2343
    %3260 = vmatprep.mubr.bf16.mxu0 %v542
    %3261 = vmatmul.mubr.bf16.gmra.mxu0 %v541
    %v3262 = vpop.f32.mrf.mxu0
    %v3263 = vadd.f32 0.0, %v3262
    %v3264 = vpop.f32.mrf.mxu0
    %v3265 = vadd.f32 0.0, %v3264
    %v3266 = vpop.f32.mrf.mxu0
    %v3267 = vpop.f32.mrf.mxu0
    %3268 = vdwg.mxu0
    %3269 = vmatprep.subr.bf16.mxu0 %v2314
    %3270 = vmatpush1.bf16.msra.mxu0 %v2313
    %3271 = vmatprep.subr.bf16.mxu0 %v2282
    %3272 = vmatpush1.bf16.msra.mxu0 %v2281
    %3273 = vmatprep.subr.bf16.mxu0 %v2250
    %3274 = vmatpush1.bf16.msra.mxu0 %v2249
    %3275 = vmatprep.subr.bf16.mxu0 %v2218
    %3276 = vmatpush1.bf16.msra.mxu0 %v2217
    %3277 = vmatprep.subr.bf16.mxu0 %v2186
    %3278 = vmatpush1.bf16.msra.mxu0 %v2185
    %3279 = vmatprep.subr.bf16.mxu0 %v2154
    %3280 = vmatpush1.bf16.msra.mxu0 %v2153
    %3281 = vmatprep.subr.bf16.mxu0 %v2122
    %3282 = vmatpush1.bf16.msra.mxu0 %v2121
    %3283 = vmatprep.subr.bf16.mxu0 %v2090
    %3284 = vmatpush1.bf16.msra.mxu0 %v2089
    %3285 = vmatprep.subr.bf16.mxu0 %v2570
    %3286 = vmatpush2.bf16.msra.mxu0 %v2569
    %3287 = vmatprep.subr.bf16.mxu0 %v2538
    %3288 = vmatpush2.bf16.msra.mxu0 %v2537
    %3289 = vmatprep.subr.bf16.mxu0 %v2506
    %3290 = vmatpush2.bf16.msra.mxu0 %v2505
    %3291 = vmatprep.subr.bf16.mxu0 %v2474
    %3292 = vmatpush2.bf16.msra.mxu0 %v2473
    %3293 = vmatprep.subr.bf16.mxu0 %v2442
    %3294 = vmatpush2.bf16.msra.mxu0 %v2441
    %3295 = vmatprep.subr.bf16.mxu0 %v2410
    %3296 = vmatpush2.bf16.msra.mxu0 %v2409
    %3297 = vmatprep.subr.bf16.mxu0 %v2378
    %3298 = vmatpush2.bf16.msra.mxu0 %v2377
    %3299 = vmatprep.subr.bf16.mxu0 %v2346
    %3300 = vmatpush2.bf16.msra.mxu0 %v2345
    %3301 = vmatprep.mubr.bf16.mxu0 %v542
    %3302 = vmatmul.mubr.bf16.gmra.mxu0 %v541
    %v3303 = vpop.f32.mrf.mxu0
    %v3304 = vadd.f32 0.0, %v3303
    %v3305 = vpop.f32.mrf.mxu0
    %v3306 = vadd.f32 0.0, %v3305
    %v3307 = vpop.f32.mrf.mxu0
    %v3308 = vpop.f32.mrf.mxu0
    %3309 = vdwg.mxu0
    %3310 = vmatprep.subr.bf16.mxu0 %v2316
    %3311 = vmatpush1.bf16.msra.mxu0 %v2315
    %3312 = vmatprep.subr.bf16.mxu0 %v2284
    %3313 = vmatpush1.bf16.msra.mxu0 %v2283
    %3314 = vmatprep.subr.bf16.mxu0 %v2252
    %3315 = vmatpush1.bf16.msra.mxu0 %v2251
    %3316 = vmatprep.subr.bf16.mxu0 %v2220
    %3317 = vmatpush1.bf16.msra.mxu0 %v2219
    %3318 = vmatprep.subr.bf16.mxu0 %v2188
    %3319 = vmatpush1.bf16.msra.mxu0 %v2187
    %3320 = vmatprep.subr.bf16.mxu0 %v2156
    %3321 = vmatpush1.bf16.msra.mxu0 %v2155
    %3322 = vmatprep.subr.bf16.mxu0 %v2124
    %3323 = vmatpush1.bf16.msra.mxu0 %v2123
    %3324 = vmatprep.subr.bf16.mxu0 %v2092
    %3325 = vmatpush1.bf16.msra.mxu0 %v2091
    %3326 = vmatprep.subr.bf16.mxu0 %v2572
    %3327 = vmatpush2.bf16.msra.mxu0 %v2571
    %3328 = vmatprep.subr.bf16.mxu0 %v2540
    %3329 = vmatpush2.bf16.msra.mxu0 %v2539
    %3330 = vmatprep.subr.bf16.mxu0 %v2508
    %3331 = vmatpush2.bf16.msra.mxu0 %v2507
    %3332 = vmatprep.subr.bf16.mxu0 %v2476
    %3333 = vmatpush2.bf16.msra.mxu0 %v2475
    %3334 = vmatprep.subr.bf16.mxu0 %v2444
    %3335 = vmatpush2.bf16.msra.mxu0 %v2443
    %3336 = vmatprep.subr.bf16.mxu0 %v2412
    %3337 = vmatpush2.bf16.msra.mxu0 %v2411
    %3338 = vmatprep.subr.bf16.mxu0 %v2380
    %3339 = vmatpush2.bf16.msra.mxu0 %v2379
    %3340 = vmatprep.subr.bf16.mxu0 %v2348
    %3341 = vmatpush2.bf16.msra.mxu0 %v2347
    %3342 = vmatprep.mubr.bf16.mxu0 %v542
    %3343 = vmatmul.mubr.bf16.gmra.mxu0 %v541
    %v3344 = vpop.f32.mrf.mxu0
    %v3345 = vadd.f32 0.0, %v3344
    %v3346 = vpop.f32.mrf.mxu0
    %v3347 = vadd.f32 0.0, %v3346
    %v3348 = vpop.f32.mrf.mxu0
    %v3349 = vpop.f32.mrf.mxu0
    %3350 = vdwg.mxu0
    %3351 = vmatprep.subr.bf16.mxu0 %v2318
    %3352 = vmatpush1.bf16.msra.mxu0 %v2317
    %3353 = vmatprep.subr.bf16.mxu0 %v2286
    %3354 = vmatpush1.bf16.msra.mxu0 %v2285
    %3355 = vmatprep.subr.bf16.mxu0 %v2254
    %3356 = vmatpush1.bf16.msra.mxu0 %v2253
    %3357 = vmatprep.subr.bf16.mxu0 %v2222
    %3358 = vmatpush1.bf16.msra.mxu0 %v2221
    %3359 = vmatprep.subr.bf16.mxu0 %v2190
    %3360 = vmatpush1.bf16.msra.mxu0 %v2189
    %3361 = vmatprep.subr.bf16.mxu0 %v2158
    %3362 = vmatpush1.bf16.msra.mxu0 %v2157
    %3363 = vmatprep.subr.bf16.mxu0 %v2126
    %3364 = vmatpush1.bf16.msra.mxu0 %v2125
    %3365 = vmatprep.subr.bf16.mxu0 %v2094
    %3366 = vmatpush1.bf16.msra.mxu0 %v2093
    %3367 = vmatprep.subr.bf16.mxu0 %v2574
    %3368 = vmatpush2.bf16.msra.mxu0 %v2573
    %3369 = vmatprep.subr.bf16.mxu0 %v2542
    %3370 = vmatpush2.bf16.msra.mxu0 %v2541
    %3371 = vmatprep.subr.bf16.mxu0 %v2510
    %3372 = vmatpush2.bf16.msra.mxu0 %v2509
    %3373 = vmatprep.subr.bf16.mxu0 %v2478
    %3374 = vmatpush2.bf16.msra.mxu0 %v2477
    %3375 = vmatprep.subr.bf16.mxu0 %v2446
    %3376 = vmatpush2.bf16.msra.mxu0 %v2445
    %3377 = vmatprep.subr.bf16.mxu0 %v2414
    %3378 = vmatpush2.bf16.msra.mxu0 %v2413
    %3379 = vmatprep.subr.bf16.mxu0 %v2382
    %3380 = vmatpush2.bf16.msra.mxu0 %v2381
    %3381 = vmatprep.subr.bf16.mxu0 %v2350
    %3382 = vmatpush2.bf16.msra.mxu0 %v2349
    %3383 = vmatprep.mubr.bf16.mxu0 %v542
    %3384 = vmatmul.mubr.bf16.gmra.mxu0 %v541
    %v3385 = vpop.f32.mrf.mxu0
    %v3386 = vadd.f32 0.0, %v3385
    %v3387 = vpop.f32.mrf.mxu0
    %v3388 = vadd.f32 0.0, %v3387
    %v3389 = vpop.f32.mrf.mxu0
    %v3390 = vpop.f32.mrf.mxu0
    %3391 = vdwg.mxu0
    %3392 = vmatprep.subr.bf16.mxu0 %v2320
    %3393 = vmatpush1.bf16.msra.mxu0 %v2319
    %3394 = vmatprep.subr.bf16.mxu0 %v2288
    %3395 = vmatpush1.bf16.msra.mxu0 %v2287
    %3396 = vmatprep.subr.bf16.mxu0 %v2256
    %3397 = vmatpush1.bf16.msra.mxu0 %v2255
    %3398 = vmatprep.subr.bf16.mxu0 %v2224
    %3399 = vmatpush1.bf16.msra.mxu0 %v2223
    %3400 = vmatprep.subr.bf16.mxu0 %v2192
    %3401 = vmatpush1.bf16.msra.mxu0 %v2191
    %3402 = vmatprep.subr.bf16.mxu0 %v2160
    %3403 = vmatpush1.bf16.msra.mxu0 %v2159
    %3404 = vmatprep.subr.bf16.mxu0 %v2128
    %3405 = vmatpush1.bf16.msra.mxu0 %v2127
    %3406 = vmatprep.subr.bf16.mxu0 %v2096
    %3407 = vmatpush1.bf16.msra.mxu0 %v2095
    %3408 = vmatprep.subr.bf16.mxu0 %v2576
    %3409 = vmatpush2.bf16.msra.mxu0 %v2575
    %3410 = vmatprep.subr.bf16.mxu0 %v2544
    %3411 = vmatpush2.bf16.msra.mxu0 %v2543
    %3412 = vmatprep.subr.bf16.mxu0 %v2512
    %3413 = vmatpush2.bf16.msra.mxu0 %v2511
    %3414 = vmatprep.subr.bf16.mxu0 %v2480
    %3415 = vmatpush2.bf16.msra.mxu0 %v2479
    %3416 = vmatprep.subr.bf16.mxu0 %v2448
    %3417 = vmatpush2.bf16.msra.mxu0 %v2447
    %3418 = vmatprep.subr.bf16.mxu0 %v2416
    %3419 = vmatpush2.bf16.msra.mxu0 %v2415
    %3420 = vmatprep.subr.bf16.mxu0 %v2384
    %3421 = vmatpush2.bf16.msra.mxu0 %v2383
    %3422 = vmatprep.subr.bf16.mxu0 %v2352
    %3423 = vmatpush2.bf16.msra.mxu0 %v2351
    %3424 = vmatprep.mubr.bf16.mxu0 %v542
    %3425 = vmatmul.mubr.bf16.gmra.mxu0 %v541
    %v3426 = vpop.f32.mrf.mxu0
    %v3427 = vadd.f32 0.0, %v3426
    %v3428 = vpop.f32.mrf.mxu0
    %v3429 = vadd.f32 0.0, %v3428
    %v3430 = vpop.f32.mrf.mxu0
    %v3431 = vpop.f32.mrf.mxu0
    %3432 = vdwg.mxu0
    %3433 = vmatprep.subr.bf16.mxu0 %v2322
    %3434 = vmatpush1.bf16.msra.mxu0 %v2321
    %3435 = vmatprep.subr.bf16.mxu0 %v2290
    %3436 = vmatpush1.bf16.msra.mxu0 %v2289
    %3437 = vmatprep.subr.bf16.mxu0 %v2258
    %3438 = vmatpush1.bf16.msra.mxu0 %v2257
    %3439 = vmatprep.subr.bf16.mxu0 %v2226
    %3440 = vmatpush1.bf16.msra.mxu0 %v2225
    %3441 = vmatprep.subr.bf16.mxu0 %v2194
    %3442 = vmatpush1.bf16.msra.mxu0 %v2193
    %3443 = vmatprep.subr.bf16.mxu0 %v2162
    %3444 = vmatpush1.bf16.msra.mxu0 %v2161
    %3445 = vmatprep.subr.bf16.mxu0 %v2130
    %3446 = vmatpush1.bf16.msra.mxu0 %v2129
    %3447 = vmatprep.subr.bf16.mxu0 %v2098
    %3448 = vmatpush1.bf16.msra.mxu0 %v2097
    %3449 = vmatprep.subr.bf16.mxu0 %v2578
    %3450 = vmatpush2.bf16.msra.mxu0 %v2577
    %3451 = vmatprep.subr.bf16.mxu0 %v2546
    %3452 = vmatpush2.bf16.msra.mxu0 %v2545
    %3453 = vmatprep.subr.bf16.mxu0 %v2514
    %3454 = vmatpush2.bf16.msra.mxu0 %v2513
    %3455 = vmatprep.subr.bf16.mxu0 %v2482
    %3456 = vmatpush2.bf16.msra.mxu0 %v2481
    %3457 = vmatprep.subr.bf16.mxu0 %v2450
    %3458 = vmatpush2.bf16.msra.mxu0 %v2449
    %3459 = vmatprep.subr.bf16.mxu0 %v2418
    %3460 = vmatpush2.bf16.msra.mxu0 %v2417
    %3461 = vmatprep.subr.bf16.mxu0 %v2386
    %3462 = vmatpush2.bf16.msra.mxu0 %v2385
    %3463 = vmatprep.subr.bf16.mxu0 %v2354
    %3464 = vmatpush2.bf16.msra.mxu0 %v2353
    %3465 = vmatprep.mubr.bf16.mxu0 %v542
    %3466 = vmatmul.mubr.bf16.gmra.mxu0 %v541
    %v3467 = vpop.f32.mrf.mxu0
    %v3468 = vadd.f32 0.0, %v3467
    %v3469 = vpop.f32.mrf.mxu0
    %v3470 = vadd.f32 0.0, %v3469
    %v3471 = vpop.f32.mrf.mxu0
    %v3472 = vpop.f32.mrf.mxu0
    %3473 = vdwg.mxu0
    %3474 = vmatprep.subr.bf16.mxu0 %v2324
    %3475 = vmatpush1.bf16.msra.mxu0 %v2323
    %3476 = vmatprep.subr.bf16.mxu0 %v2292
    %3477 = vmatpush1.bf16.msra.mxu0 %v2291
    %3478 = vmatprep.subr.bf16.mxu0 %v2260
    %3479 = vmatpush1.bf16.msra.mxu0 %v2259
    %3480 = vmatprep.subr.bf16.mxu0 %v2228
    %3481 = vmatpush1.bf16.msra.mxu0 %v2227
    %3482 = vmatprep.subr.bf16.mxu0 %v2196
    %3483 = vmatpush1.bf16.msra.mxu0 %v2195
    %3484 = vmatprep.subr.bf16.mxu0 %v2164
    %3485 = vmatpush1.bf16.msra.mxu0 %v2163
    %3486 = vmatprep.subr.bf16.mxu0 %v2132
    %3487 = vmatpush1.bf16.msra.mxu0 %v2131
    %3488 = vmatprep.subr.bf16.mxu0 %v2100
    %3489 = vmatpush1.bf16.msra.mxu0 %v2099
    %3490 = vmatprep.subr.bf16.mxu0 %v2580
    %3491 = vmatpush2.bf16.msra.mxu0 %v2579
    %3492 = vmatprep.subr.bf16.mxu0 %v2548
    %3493 = vmatpush2.bf16.msra.mxu0 %v2547
    %3494 = vmatprep.subr.bf16.mxu0 %v2516
    %3495 = vmatpush2.bf16.msra.mxu0 %v2515
    %3496 = vmatprep.subr.bf16.mxu0 %v2484
    %3497 = vmatpush2.bf16.msra.mxu0 %v2483
    %3498 = vmatprep.subr.bf16.mxu0 %v2452
    %3499 = vmatpush2.bf16.msra.mxu0 %v2451
    %3500 = vmatprep.subr.bf16.mxu0 %v2420
    %3501 = vmatpush2.bf16.msra.mxu0 %v2419
    %3502 = vmatprep.subr.bf16.mxu0 %v2388
    %3503 = vmatpush2.bf16.msra.mxu0 %v2387
    %3504 = vmatprep.subr.bf16.mxu0 %v2356
    %3505 = vmatpush2.bf16.msra.mxu0 %v2355
    %3506 = vmatprep.mubr.bf16.mxu0 %v542
    %3507 = vmatmul.mubr.bf16.gmra.mxu0 %v541
    %v3508 = vpop.f32.mrf.mxu0
    %v3509 = vadd.f32 0.0, %v3508
    %v3510 = vpop.f32.mrf.mxu0
    %v3511 = vadd.f32 0.0, %v3510
    %v3512 = vpop.f32.mrf.mxu0
    %v3513 = vpop.f32.mrf.mxu0
    %3514 = vdwg.mxu0
    %3515 = vmatprep.subr.bf16.mxu0 %v2326
    %3516 = vmatpush1.bf16.msra.mxu0 %v2325
    %3517 = vmatprep.subr.bf16.mxu0 %v2294
    %3518 = vmatpush1.bf16.msra.mxu0 %v2293
    %3519 = vmatprep.subr.bf16.mxu0 %v2262
    %3520 = vmatpush1.bf16.msra.mxu0 %v2261
    %3521 = vmatprep.subr.bf16.mxu0 %v2230
    %3522 = vmatpush1.bf16.msra.mxu0 %v2229
    %3523 = vmatprep.subr.bf16.mxu0 %v2198
    %3524 = vmatpush1.bf16.msra.mxu0 %v2197
    %3525 = vmatprep.subr.bf16.mxu0 %v2166
    %3526 = vmatpush1.bf16.msra.mxu0 %v2165
    %3527 = vmatprep.subr.bf16.mxu0 %v2134
    %3528 = vmatpush1.bf16.msra.mxu0 %v2133
    %3529 = vmatprep.subr.bf16.mxu0 %v2102
    %3530 = vmatpush1.bf16.msra.mxu0 %v2101
    %3531 = vmatprep.subr.bf16.mxu0 %v2582
    %3532 = vmatpush2.bf16.msra.mxu0 %v2581
    %3533 = vmatprep.subr.bf16.mxu0 %v2550
    %3534 = vmatpush2.bf16.msra.mxu0 %v2549
    %3535 = vmatprep.subr.bf16.mxu0 %v2518
    %3536 = vmatpush2.bf16.msra.mxu0 %v2517
    %3537 = vmatprep.subr.bf16.mxu0 %v2486
    %3538 = vmatpush2.bf16.msra.mxu0 %v2485
    %3539 = vmatprep.subr.bf16.mxu0 %v2454
    %3540 = vmatpush2.bf16.msra.mxu0 %v2453
    %3541 = vmatprep.subr.bf16.mxu0 %v2422
    %3542 = vmatpush2.bf16.msra.mxu0 %v2421
    %3543 = vmatprep.subr.bf16.mxu0 %v2390
    %3544 = vmatpush2.bf16.msra.mxu0 %v2389
    %3545 = vmatprep.subr.bf16.mxu0 %v2358
    %3546 = vmatpush2.bf16.msra.mxu0 %v2357
    %3547 = vmatprep.mubr.bf16.mxu0 %v542
    %3548 = vmatmul.mubr.bf16.gmra.mxu0 %v541
    %v3549 = vpop.f32.mrf.mxu0
    %v3550 = vadd.f32 0.0, %v3549
    %v3551 = vpop.f32.mrf.mxu0
    %v3552 = vadd.f32 0.0, %v3551
    %v3553 = vpop.f32.mrf.mxu0
    %v3554 = vpop.f32.mrf.mxu0
    %3555 = vdwg.mxu0
    %3556 = vmatprep.subr.bf16.mxu0 %v2328
    %3557 = vmatpush1.bf16.msra.mxu0 %v2327
    %3558 = vmatprep.subr.bf16.mxu0 %v2296
    %3559 = vmatpush1.bf16.msra.mxu0 %v2295
    %3560 = vmatprep.subr.bf16.mxu0 %v2264
    %3561 = vmatpush1.bf16.msra.mxu0 %v2263
    %3562 = vmatprep.subr.bf16.mxu0 %v2232
    %3563 = vmatpush1.bf16.msra.mxu0 %v2231
    %3564 = vmatprep.subr.bf16.mxu0 %v2200
    %3565 = vmatpush1.bf16.msra.mxu0 %v2199
    %3566 = vmatprep.subr.bf16.mxu0 %v2168
    %3567 = vmatpush1.bf16.msra.mxu0 %v2167
    %3568 = vmatprep.subr.bf16.mxu0 %v2136
    %3569 = vmatpush1.bf16.msra.mxu0 %v2135
    %3570 = vmatprep.subr.bf16.mxu0 %v2104
    %3571 = vmatpush1.bf16.msra.mxu0 %v2103
    %3572 = vmatprep.subr.bf16.mxu0 %v2584
    %3573 = vmatpush2.bf16.msra.mxu0 %v2583
    %3574 = vmatprep.subr.bf16.mxu0 %v2552
    %3575 = vmatpush2.bf16.msra.mxu0 %v2551
    %3576 = vmatprep.subr.bf16.mxu0 %v2520
    %3577 = vmatpush2.bf16.msra.mxu0 %v2519
    %3578 = vmatprep.subr.bf16.mxu0 %v2488
    %3579 = vmatpush2.bf16.msra.mxu0 %v2487
    %3580 = vmatprep.subr.bf16.mxu0 %v2456
    %3581 = vmatpush2.bf16.msra.mxu0 %v2455
    %3582 = vmatprep.subr.bf16.mxu0 %v2424
    %3583 = vmatpush2.bf16.msra.mxu0 %v2423
    %3584 = vmatprep.subr.bf16.mxu0 %v2392
    %3585 = vmatpush2.bf16.msra.mxu0 %v2391
    %3586 = vmatprep.subr.bf16.mxu0 %v2360
    %3587 = vmatpush2.bf16.msra.mxu0 %v2359
    %3588 = vmatprep.mubr.bf16.mxu0 %v542
    %3589 = vmatmul.mubr.bf16.gmra.mxu0 %v541
    %v3590 = vpop.f32.mrf.mxu0
    %v3591 = vadd.f32 0.0, %v3590
    %v3592 = vpop.f32.mrf.mxu0
    %v3593 = vadd.f32 0.0, %v3592
    %v3594 = vpop.f32.mrf.mxu0
    %v3595 = vpop.f32.mrf.mxu0
    %3596 = vdwg.mxu0
    %3597 = vmatprep.subr.bf16.mxu0 %v2330
    %3598 = vmatpush1.bf16.msra.mxu0 %v2329
    %3599 = vmatprep.subr.bf16.mxu0 %v2298
    %3600 = vmatpush1.bf16.msra.mxu0 %v2297
    %3601 = vmatprep.subr.bf16.mxu0 %v2266
    %3602 = vmatpush1.bf16.msra.mxu0 %v2265
    %3603 = vmatprep.subr.bf16.mxu0 %v2234
    %3604 = vmatpush1.bf16.msra.mxu0 %v2233
    %3605 = vmatprep.subr.bf16.mxu0 %v2202
    %3606 = vmatpush1.bf16.msra.mxu0 %v2201
    %3607 = vmatprep.subr.bf16.mxu0 %v2170
    %3608 = vmatpush1.bf16.msra.mxu0 %v2169
    %3609 = vmatprep.subr.bf16.mxu0 %v2138
    %3610 = vmatpush1.bf16.msra.mxu0 %v2137
    %3611 = vmatprep.subr.bf16.mxu0 %v2106
    %3612 = vmatpush1.bf16.msra.mxu0 %v2105
    %3613 = vmatprep.subr.bf16.mxu0 %v2586
    %3614 = vmatpush2.bf16.msra.mxu0 %v2585
    %3615 = vmatprep.subr.bf16.mxu0 %v2554
    %3616 = vmatpush2.bf16.msra.mxu0 %v2553
    %3617 = vmatprep.subr.bf16.mxu0 %v2522
    %3618 = vmatpush2.bf16.msra.mxu0 %v2521
    %3619 = vmatprep.subr.bf16.mxu0 %v2490
    %3620 = vmatpush2.bf16.msra.mxu0 %v2489
    %3621 = vmatprep.subr.bf16.mxu0 %v2458
    %3622 = vmatpush2.bf16.msra.mxu0 %v2457
    %3623 = vmatprep.subr.bf16.mxu0 %v2426
    %3624 = vmatpush2.bf16.msra.mxu0 %v2425
    %3625 = vmatprep.subr.bf16.mxu0 %v2394
    %3626 = vmatpush2.bf16.msra.mxu0 %v2393
    %3627 = vmatprep.subr.bf16.mxu0 %v2362
    %3628 = vmatpush2.bf16.msra.mxu0 %v2361
    %3629 = vmatprep.mubr.bf16.mxu0 %v542
    %3630 = vmatmul.mubr.bf16.gmra.mxu0 %v541
    %v3631 = vpop.f32.mrf.mxu0
    %v3632 = vadd.f32 0.0, %v3631
    %v3633 = vpop.f32.mrf.mxu0
    %v3634 = vadd.f32 0.0, %v3633
    %v3635 = vpop.f32.mrf.mxu0
    %v3636 = vpop.f32.mrf.mxu0
    %3637 = vdwg.mxu0
    %3638 = vmatprep.subr.bf16.mxu0 %v2332
    %3639 = vmatpush1.bf16.msra.mxu0 %v2331
    %3640 = vmatprep.subr.bf16.mxu0 %v2300
    %3641 = vmatpush1.bf16.msra.mxu0 %v2299
    %3642 = vmatprep.subr.bf16.mxu0 %v2268
    %3643 = vmatpush1.bf16.msra.mxu0 %v2267
    %3644 = vmatprep.subr.bf16.mxu0 %v2236
    %3645 = vmatpush1.bf16.msra.mxu0 %v2235
    %3646 = vmatprep.subr.bf16.mxu0 %v2204
    %3647 = vmatpush1.bf16.msra.mxu0 %v2203
    %3648 = vmatprep.subr.bf16.mxu0 %v2172
    %3649 = vmatpush1.bf16.msra.mxu0 %v2171
    %3650 = vmatprep.subr.bf16.mxu0 %v2140
    %3651 = vmatpush1.bf16.msra.mxu0 %v2139
    %3652 = vmatprep.subr.bf16.mxu0 %v2108
    %3653 = vmatpush1.bf16.msra.mxu0 %v2107
    %3654 = vmatprep.subr.bf16.mxu0 %v2588
    %3655 = vmatpush2.bf16.msra.mxu0 %v2587
    %3656 = vmatprep.subr.bf16.mxu0 %v2556
    %3657 = vmatpush2.bf16.msra.mxu0 %v2555
    %3658 = vmatprep.subr.bf16.mxu0 %v2524
    %3659 = vmatpush2.bf16.msra.mxu0 %v2523
    %3660 = vmatprep.subr.bf16.mxu0 %v2492
    %3661 = vmatpush2.bf16.msra.mxu0 %v2491
    %3662 = vmatprep.subr.bf16.mxu0 %v2460
    %3663 = vmatpush2.bf16.msra.mxu0 %v2459
    %3664 = vmatprep.subr.bf16.mxu0 %v2428
    %3665 = vmatpush2.bf16.msra.mxu0 %v2427
    %3666 = vmatprep.subr.bf16.mxu0 %v2396
    %3667 = vmatpush2.bf16.msra.mxu0 %v2395
    %3668 = vmatprep.subr.bf16.mxu0 %v2364
    %3669 = vmatpush2.bf16.msra.mxu0 %v2363
    %3670 = vmatprep.mubr.bf16.mxu0 %v542
    %3671 = vmatmul.mubr.bf16.gmra.mxu0 %v541
    %v3672 = vpop.f32.mrf.mxu0
    %v3673 = vadd.f32 0.0, %v3672
    %v3674 = vpop.f32.mrf.mxu0
    %v3675 = vadd.f32 0.0, %v3674
    %v3676 = vpop.f32.mrf.mxu0
    %v3677 = vpop.f32.mrf.mxu0
    %3678 = vdwg.mxu0
    %3679 = vmatprep.subr.bf16.mxu0 %v2334
    %3680 = vmatpush1.bf16.msra.mxu0 %v2333
    %3681 = vmatprep.subr.bf16.mxu0 %v2302
    %3682 = vmatpush1.bf16.msra.mxu0 %v2301
    %3683 = vmatprep.subr.bf16.mxu0 %v2270
    %3684 = vmatpush1.bf16.msra.mxu0 %v2269
    %3685 = vmatprep.subr.bf16.mxu0 %v2238
    %3686 = vmatpush1.bf16.msra.mxu0 %v2237
    %3687 = vmatprep.subr.bf16.mxu0 %v2206
    %3688 = vmatpush1.bf16.msra.mxu0 %v2205
    %3689 = vmatprep.subr.bf16.mxu0 %v2174
    %3690 = vmatpush1.bf16.msra.mxu0 %v2173
    %3691 = vmatprep.subr.bf16.mxu0 %v2142
    %3692 = vmatpush1.bf16.msra.mxu0 %v2141
    %3693 = vmatprep.subr.bf16.mxu0 %v2110
    %3694 = vmatpush1.bf16.msra.mxu0 %v2109
    %3695 = vmatprep.subr.bf16.mxu0 %v2590
    %3696 = vmatpush2.bf16.msra.mxu0 %v2589
    %3697 = vmatprep.subr.bf16.mxu0 %v2558
    %3698 = vmatpush2.bf16.msra.mxu0 %v2557
    %3699 = vmatprep.subr.bf16.mxu0 %v2526
    %3700 = vmatpush2.bf16.msra.mxu0 %v2525
    %3701 = vmatprep.subr.bf16.mxu0 %v2494
    %3702 = vmatpush2.bf16.msra.mxu0 %v2493
    %3703 = vmatprep.subr.bf16.mxu0 %v2462
    %3704 = vmatpush2.bf16.msra.mxu0 %v2461
    %3705 = vmatprep.subr.bf16.mxu0 %v2430
    %3706 = vmatpush2.bf16.msra.mxu0 %v2429
    %3707 = vmatprep.subr.bf16.mxu0 %v2398
    %3708 = vmatpush2.bf16.msra.mxu0 %v2397
    %3709 = vmatprep.subr.bf16.mxu0 %v2366
    %3710 = vmatpush2.bf16.msra.mxu0 %v2365
    %3711 = vmatprep.mubr.bf16.mxu0 %v542
    %3712 = vmatmul.mubr.bf16.gmra.mxu0 %v541
    %v3713 = vpop.f32.mrf.mxu0
    %v3714 = vadd.f32 0.0, %v3713
    %v3715 = vpop.f32.mrf.mxu0
    %v3716 = vadd.f32 0.0, %v3715
    %v3717 = vpop.f32.mrf.mxu0
    %v3718 = vpop.f32.mrf.mxu0
    %3719 = vdwg.mxu0
    %3720 = vmatprep.subr.bf16.mxu0 %v2336
    %3721 = vmatpush1.bf16.msra.mxu0 %v2335
    %3722 = vmatprep.subr.bf16.mxu0 %v2304
    %3723 = vmatpush1.bf16.msra.mxu0 %v2303
    %3724 = vmatprep.subr.bf16.mxu0 %v2272
    %3725 = vmatpush1.bf16.msra.mxu0 %v2271
    %3726 = vmatprep.subr.bf16.mxu0 %v2240
    %3727 = vmatpush1.bf16.msra.mxu0 %v2239
    %3728 = vmatprep.subr.bf16.mxu0 %v2208
    %3729 = vmatpush1.bf16.msra.mxu0 %v2207
    %3730 = vmatprep.subr.bf16.mxu0 %v2176
    %3731 = vmatpush1.bf16.msra.mxu0 %v2175
    %3732 = vmatprep.subr.bf16.mxu0 %v2144
    %3733 = vmatpush1.bf16.msra.mxu0 %v2143
    %3734 = vmatprep.subr.bf16.mxu0 %v2112
    %3735 = vmatpush1.bf16.msra.mxu0 %v2111
    %3736 = vmatprep.subr.bf16.mxu0 %v2592
    %3737 = vmatpush2.bf16.msra.mxu0 %v2591
    %3738 = vmatprep.subr.bf16.mxu0 %v2560
    %3739 = vmatpush2.bf16.msra.mxu0 %v2559
    %3740 = vmatprep.subr.bf16.mxu0 %v2528
    %3741 = vmatpush2.bf16.msra.mxu0 %v2527
    %3742 = vmatprep.subr.bf16.mxu0 %v2496
    %3743 = vmatpush2.bf16.msra.mxu0 %v2495
    %3744 = vmatprep.subr.bf16.mxu0 %v2464
    %3745 = vmatpush2.bf16.msra.mxu0 %v2463
    %3746 = vmatprep.subr.bf16.mxu0 %v2432
    %3747 = vmatpush2.bf16.msra.mxu0 %v2431
    %3748 = vmatprep.subr.bf16.mxu0 %v2400
    %3749 = vmatpush2.bf16.msra.mxu0 %v2399
    %3750 = vmatprep.subr.bf16.mxu0 %v2368
    %3751 = vmatpush2.bf16.msra.mxu0 %v2367
    %3752 = vmatprep.mubr.bf16.mxu0 %v542
    %3753 = vmatmul.mubr.bf16.gmra.mxu0 %v541
    %v3754 = vpop.f32.mrf.mxu0
    %v3755 = vadd.f32 0.0, %v3754
    %v3756 = vpop.f32.mrf.mxu0
    %v3757 = vadd.f32 0.0, %v3756
    %v3758 = vpop.f32.mrf.mxu0
    %v3759 = vpop.f32.mrf.mxu0
    %3760 = vdwg.mxu0
    %3761 = vst [vmem:[%s2] sm:$0xff] %v3140
    %3762 = vst [vmem:[%s2 + $0x8] sm:$0xff] %v3142
    %3763 = vst [vmem:[%s2 + $0x10] sm:$0xff] %v3181
    %3764 = vst [vmem:[%s2 + $0x18] sm:$0xff] %v3183
    %3765 = vst [vmem:[%s2 + $0x20] sm:$0xff] %v3222
    %3766 = vst [vmem:[%s2 + $0x28] sm:$0xff] %v3224
    %3767 = vst [vmem:[%s2 + $0x30] sm:$0xff] %v3263
    %3768 = vst [vmem:[%s2 + $0x38] sm:$0xff] %v3265
    %3769 = vst [vmem:[%s2 + $0x40] sm:$0xff] %v3304
    %3770 = vst [vmem:[%s2 + $0x48] sm:$0xff] %v3306
    %3771 = vst [vmem:[%s2 + $0x50] sm:$0xff] %v3345
    %3772 = vst [vmem:[%s2 + $0x58] sm:$0xff] %v3347
    %3773 = vst [vmem:[%s2 + $0x60] sm:$0xff] %v3386
    %3774 = vst [vmem:[%s2 + $0x68] sm:$0xff] %v3388
    %3775 = vst [vmem:[%s2 + $0x70] sm:$0xff] %v3427
    %3776 = vst [vmem:[%s2 + $0x78] sm:$0xff] %v3429
    %3777 = vst [vmem:[%s2 + $0x80] sm:$0xff] %v3468
    %3778 = vst [vmem:[%s2 + $0x88] sm:$0xff] %v3470
    %3779 = vst [vmem:[%s2 + $0x90] sm:$0xff] %v3509
    %3780 = vst [vmem:[%s2 + $0x98] sm:$0xff] %v3511
    %3781 = vst [vmem:[%s2 + $0xa0] sm:$0xff] %v3550
    %3782 = vst [vmem:[%s2 + $0xa8] sm:$0xff] %v3552
    %3783 = vst [vmem:[%s2 + $0xb0] sm:$0xff] %v3591
    %3784 = vst [vmem:[%s2 + $0xb8] sm:$0xff] %v3593
    %3785 = vst [vmem:[%s2 + $0xc0] sm:$0xff] %v3632
    %3786 = vst [vmem:[%s2 + $0xc8] sm:$0xff] %v3634
    %3787 = vst [vmem:[%s2 + $0xd0] sm:$0xff] %v3673
    %3788 = vst [vmem:[%s2 + $0xd8] sm:$0xff] %v3675
    %3789 = vst [vmem:[%s2 + $0xe0] sm:$0xff] %v3714
    %3790 = vst [vmem:[%s2 + $0xe8] sm:$0xff] %v3716
    %3791 = vst [vmem:[%s2 + $0xf0] sm:$0xff] %v3755
    %3792 = vst [vmem:[%s2 + $0xf8] sm:$0xff] %v3757
    // Predicated region
    $region14: #{_forward.1} parent=1 // pred_check
      _
    $region15: #{_forward.1} parent=1 // pred_check_branch
      %3794 = sbr.rel (0) target = $region17
    $region16: #{_forward.1} parent=1 // pred_region
      _
    $region17: #{_forward.1} parent=1 // pred_fallthru
      _
    // Predicated region
    $region18: #{_forward.1} parent=1 // pred_check
      _
    $region19: #{_forward.1} parent=1 // pred_check_branch
      %3796 = sbr.rel (0) target = $region21
    $region20: #{_forward.1} parent=1 // pred_region
      _
    $region21: #{_forward.1} parent=1 // pred_fallthru
      _
    %3797 = vsyncpa [#allocation3], 1

</llo_original>
